<compile_context>
chip_gen: v6e
topology: v6e:2x2x1
jax: 0.10.0
libtpu: 0.0.40
codegen_flags: <defaults>
</compile_context>

<pallas_src>
import functools
import math

import jax
import jax.numpy as jnp
from jax import lax
from jax.experimental import pallas as pl
from jax.experimental.pallas import tpu as pltpu


# Scoped-VMEM budget: tile choices below use <~16 MiB, leaving >=16 MiB headroom even
# on v7x (64 MiB physical per TC); v5e/v6e have 128 MiB.
_VMEM_LIMIT = 48 * 1024 * 1024


def _pick_tile(dim, target, multiple=1):
    """Largest t <= target with dim % t == 0 and t % multiple == 0; falls back to dim."""
    t = min(target, dim)
    for cand in range(t, 0, -1):
        if dim % cand == 0 and cand % multiple == 0:
            return cand
    # TODO(synk): ragged dims would need cdiv grids + edge-block masking (or padding);
    # the full-dim fallback stays correct but can blow VMEM for large ragged S.
    return dim


# ------------------------------------------------------------------
# Fused QKV projection.
#   grid = (B, S-tiles, head-group tiles, K-tiles), K (contraction) last/'arbitrary'.
#   bf16 MXU matmuls with f32 VMEM accumulators; bias add + bf16 cast + per-head
#   scatter into (B, H, S, D) outputs happen once at K-finalize.
#   Q arrives pre-scaled by log2(e)/sqrt(D) (folded into wq/bq at param prep).
# ------------------------------------------------------------------
def _qkv_proj_kernel(x_ref, wq_ref, wk_ref, wv_ref, bq_ref, bk_ref, bv_ref,
                     q_ref, k_ref, v_ref, accq, acck, accv,
                     *, head_dim, heads_per_block):
    kk = pl.program_id(3)

    @pl.when(kk == 0)
    def _():
        accq[...] = jnp.zeros_like(accq)
        acck[...] = jnp.zeros_like(acck)
        accv[...] = jnp.zeros_like(accv)

    xb = x_ref[0]  # (tm, tk) bf16 -> MXU-native, f32 accumulate
    accq[...] += jnp.dot(xb, wq_ref[...], preferred_element_type=jnp.float32)
    acck[...] += jnp.dot(xb, wk_ref[...], preferred_element_type=jnp.float32)
    accv[...] += jnp.dot(xb, wv_ref[...], preferred_element_type=jnp.float32)

    @pl.when(kk == pl.num_programs(3) - 1)
    def _():
        D = head_dim
        # Scatter the head-packed (tm, tn) tile into per-head (tm, D) planes once at
        # finalize (amortized over the K loop) so the attention kernel never has to
        # slice lanes per head per KV step.
        for g in range(heads_per_block):
            sl = slice(g * D, (g + 1) * D)
            q_ref[0, g] = (accq[:, sl] + bq_ref[0, sl]).astype(q_ref.dtype)
            k_ref[0, g] = (acck[:, sl] + bk_ref[0, sl]).astype(k_ref.dtype)
            v_ref[0, g] = (accv[:, sl] + bv_ref[0, sl]).astype(v_ref.dtype)


def qkv_projection(x_b, wq, wk, wv, bq, bk, bv, num_heads, *, tm=512, tn=512, tk=1024):
    B, S, E = x_b.shape
    D = E // num_heads
    tm = _pick_tile(S, tm, 8)
    tn = _pick_tile(E, tn, D)      # head-group width: whole heads per output column tile
    tk = _pick_tile(E, tk, 8)      # tk == E -> effectively full-K (single reduction step)
    hpg = tn // D
    grid = (B, S // tm, E // tn, E // tk)
    out_sds = jax.ShapeDtypeStruct((B, num_heads, S, D), jnp.bfloat16)
    kern = functools.partial(_qkv_proj_kernel, head_dim=D, heads_per_block=hpg)
    return pl.pallas_call(
        kern,
        out_shape=(out_sds, out_sds, out_sds),
        grid=grid,
        in_specs=[
            pl.BlockSpec((1, tm, tk), lambda b, si, j, k: (b, si, k)),
            pl.BlockSpec((tk, tn), lambda b, si, j, k: (k, j)),
            pl.BlockSpec((tk, tn), lambda b, si, j, k: (k, j)),
            pl.BlockSpec((tk, tn), lambda b, si, j, k: (k, j)),
            pl.BlockSpec((1, tn), lambda b, si, j, k: (0, j)),
            pl.BlockSpec((1, tn), lambda b, si, j, k: (0, j)),
            pl.BlockSpec((1, tn), lambda b, si, j, k: (0, j)),
        ],
        out_specs=(
            pl.BlockSpec((1, hpg, tm, D), lambda b, si, j, k: (b, j, si, 0)),
            pl.BlockSpec((1, hpg, tm, D), lambda b, si, j, k: (b, j, si, 0)),
            pl.BlockSpec((1, hpg, tm, D), lambda b, si, j, k: (b, j, si, 0)),
        ),
        scratch_shapes=[
            pltpu.VMEM((tm, tn), jnp.float32),
            pltpu.VMEM((tm, tn), jnp.float32),
            pltpu.VMEM((tm, tn), jnp.float32),
        ],
        compiler_params=pltpu.CompilerParams(
            dimension_semantics=("parallel", "parallel", "parallel", "arbitrary"),
            vmem_limit_bytes=_VMEM_LIMIT),
    )(x_b, wq, wk, wv, bq, bk, bv)


# ------------------------------------------------------------------
# Flash attention (non-causal), one head per grid step.
#   grid = (B, H, Q-tiles, KV-tiles); KV is the reduction axis (last, 'arbitrary').
#   Q/K/V tiles are lane-dense (tq/tkv, D) bf16; Q is pre-scaled by log2(e)/sqrt(D)
#   so the online softmax uses exp2 directly.  m/l/acc live in VMEM scratch.
# ------------------------------------------------------------------
def _flash_attn_kernel(q_ref, k_ref, v_ref, o_ref, m_sc, l_sc, acc_sc):
    kv = pl.program_id(3)

    @pl.when(kv == 0)
    def _():
        m_sc[...] = jnp.full_like(m_sc, -jnp.inf)
        l_sc[...] = jnp.zeros_like(l_sc)
        acc_sc[...] = jnp.zeros_like(acc_sc)

    q = q_ref[0, 0]   # (tq,  D) bf16, already scaled by log2(e)/sqrt(D)
    k = k_ref[0, 0]   # (tkv, D) bf16
    v = v_ref[0, 0]   # (tkv, D) bf16

    # q @ k^T with f32 accumulation (contraction on D for both operands).
    s = lax.dot_general(q, k, (((1,), (1,)), ((), ())),
                        preferred_element_type=jnp.float32)        # (tq, tkv)

    m_prev = m_sc[...]                                             # (tq, 128), lanes equal
    m_cur = jnp.max(s, axis=-1, keepdims=True)                     # (tq, 1)
    m_next = jnp.maximum(m_prev, m_cur)                            # (tq, 128)
    alpha = jnp.exp2(m_prev - m_next)                              # (tq, 128)
    p = jnp.exp2(s - m_next[:, :1])                                # (tq, tkv) f32

    l_sc[...] = alpha * l_sc[...] + jnp.sum(p, axis=-1, keepdims=True)
    acc_sc[...] = alpha[:, :1] * acc_sc[...] + jnp.dot(
        p.astype(v.dtype), v, preferred_element_type=jnp.float32)  # (tq, D)
    m_sc[...] = m_next

    @pl.when(kv == pl.num_programs(3) - 1)
    def _():
        inv_l = pl.reciprocal(l_sc[:, :1], approx=True)            # (tq, 1), EUP slot
        o_ref[0, 0] = (acc_sc[...] * inv_l).astype(o_ref.dtype)    # lane-dense store


def flash_attention(q, k, v, *, tq=512, tkv=512):
    B, H, S, D = q.shape
    tq = _pick_tile(S, tq, 8)
    tkv = _pick_tile(S, tkv, 8)
    grid = (B, H, S // tq, S // tkv)
    return pl.pallas_call(
        _flash_attn_kernel,
        out_shape=jax.ShapeDtypeStruct((B, H, S, D), q.dtype),
        grid=grid,
        in_specs=[
            pl.BlockSpec((1, 1, tq, D), lambda b, h, qi, ki: (b, h, qi, 0)),
            pl.BlockSpec((1, 1, tkv, D), lambda b, h, qi, ki: (b, h, ki, 0)),
            pl.BlockSpec((1, 1, tkv, D), lambda b, h, qi, ki: (b, h, ki, 0)),
        ],
        out_specs=pl.BlockSpec((1, 1, tq, D), lambda b, h, qi, ki: (b, h, qi, 0)),
        scratch_shapes=[
            pltpu.VMEM((tq, 128), jnp.float32),   # running max m (lane-dense)
            pltpu.VMEM((tq, 128), jnp.float32),   # running sum l (lane-dense)
            pltpu.VMEM((tq, D), jnp.float32),     # output accumulator
        ],
        compiler_params=pltpu.CompilerParams(
            dimension_semantics=("parallel", "parallel", "parallel", "arbitrary"),
            vmem_limit_bytes=_VMEM_LIMIT),
    )(q, k, v)


# ------------------------------------------------------------------
# Generic tiled linear (output projection).
# ------------------------------------------------------------------
def _linear_kernel(x_ref, w_ref, b_ref, o_ref, acc_ref):
    kk = pl.program_id(2)

    @pl.when(kk == 0)
    def _():
        acc_ref[...] = jnp.zeros_like(acc_ref)

    acc_ref[...] += jnp.dot(x_ref[...], w_ref[...],
                            preferred_element_type=jnp.float32)

    @pl.when(kk == pl.num_programs(2) - 1)
    def _():
        o_ref[...] = (acc_ref[...] + b_ref[...]).astype(o_ref.dtype)


def linear(x2, w_bf16, b2_f32, out_dtype, *, tm=512, tn=512, tk=1024):
    M, Din = x2.shape
    Dout = w_bf16.shape[1]
    tm = _pick_tile(M, tm, 8)
    tn = _pick_tile(Dout, tn, 128)
    tk = _pick_tile(Din, tk, 8)     # tk == Din -> full-K, single reduction step
    grid = (M // tm, Dout // tn, Din // tk)
    return pl.pallas_call(
        _linear_kernel,
        out_shape=jax.ShapeDtypeStruct((M, Dout), out_dtype),
        grid=grid,
        in_specs=[
            pl.BlockSpec((tm, tk), lambda i, j, k: (i, k)),
            pl.BlockSpec((tk, tn), lambda i, j, k: (k, j)),
            pl.BlockSpec((1, tn), lambda i, j, k: (0, j)),
        ],
        out_specs=pl.BlockSpec((tm, tn), lambda i, j, k: (i, j)),
        scratch_shapes=[pltpu.VMEM((tm, tn), jnp.float32)],
        compiler_params=pltpu.CompilerParams(
            dimension_semantics=("parallel", "parallel", "arbitrary"),
            vmem_limit_bytes=_VMEM_LIMIT),
    )(x2, w_bf16, b2_f32)


# ------------------------------------------------------------------
# One-time parameter preparation (hoisted out of the forward):
#   split fused QKV weight, cast to bf16, fold log2(e)/sqrt(D) into Q weight+bias.
# ------------------------------------------------------------------
def prepare_params(params, num_heads):
    E = params["out_w"].shape[0]
    D = E // num_heads
    qscale = jnp.float32(math.log2(math.e) / math.sqrt(D))
    return {
        "wq": (params["qkv_w"][:, 0 * E:1 * E] * qscale).astype(jnp.bfloat16),
        "wk": params["qkv_w"][:, 1 * E:2 * E].astype(jnp.bfloat16),
        "wv": params["qkv_w"][:, 2 * E:3 * E].astype(jnp.bfloat16),
        "bq": (params["qkv_b"][0 * E:1 * E] * qscale).reshape(1, E).astype(jnp.float32),
        "bk": params["qkv_b"][1 * E:2 * E].reshape(1, E).astype(jnp.float32),
        "bv": params["qkv_b"][2 * E:3 * E].reshape(1, E).astype(jnp.float32),
        "wo": params["out_w"].astype(jnp.bfloat16),
        "bo": params["out_b"].reshape(1, E).astype(jnp.float32),
    }


# ------------------------------------------------------------------
# Full module forward.
# ------------------------------------------------------------------
def flash_transformer_self_attention(x, prepped, num_heads):
    """x: (B, S, E) float32; prepped = prepare_params(...). Returns (out, None)."""
    B, S, E = x.shape
    M = B * S

    # TODO(synk): torch.float16 cast emulated with bfloat16 (TPU-native half precision).
    x_b = x.astype(jnp.bfloat16)   # pre-cast once; halves x DMA inside the QKV kernel

    q, k, v = qkv_projection(x_b, prepped["wq"], prepped["wk"], prepped["wv"],
                             prepped["bq"], prepped["bk"], prepped["bv"],
                             num_heads)                          # (B, H, S, D) bf16 each

    attn = flash_attention(q, k, v)                              # (B, H, S, D) bf16

    # TODO(synk): (B,H,S,D)->(B,S,E) relayout is one XLA transpose; fusing it into the
    # attention epilogue needs D % 128 == 0 column stores (or a head-contraction out-proj).
    attn_bse = jnp.transpose(attn, (0, 2, 1, 3)).reshape(M, E)

    out = linear(attn_bse, prepped["wo"], prepped["bo"], x.dtype).reshape(B, S, E)
    return out, None


# ------------------------------------------------------------------
# Deterministic parameter init (nn.Linear-style uniform bounds).
# ------------------------------------------------------------------
def init_params(key, embed_dim):
    k1, k2, k3, k4 = jax.random.split(key, 4)
    bound = 1.0 / math.sqrt(embed_dim)
    # Stored as (in, out) so kernels do x @ W (torch stores (out, in)).
    qkv_w = jax.random.uniform(k1, (embed_dim, 3 * embed_dim), jnp.float32, -bound, bound)
    qkv_b = jax.random.uniform(k2, (3 * embed_dim,), jnp.float32, -bound, bound)
    out_w = jax.random.uniform(k3, (embed_dim, embed_dim), jnp.float32, -bound, bound)
    out_b = jax.random.uniform(k4, (embed_dim,), jnp.float32, -bound, bound)
    return {"qkv_w": qkv_w, "qkv_b": qkv_b, "out_w": out_w, "out_b": out_b}


# ------------------------------------------------------------------
# Pure-JAX reference for a sanity check.
# ------------------------------------------------------------------
def reference(x, params, num_heads):
    B, S, E = x.shape
    D = E // num_heads
    qkv = (x @ params["qkv_w"] + params["qkv_b"]).reshape(B, S, 3, num_heads, D)
    qkv = qkv.astype(jnp.bfloat16)
    q = qkv[:, :, 0].transpose(0, 2, 1, 3).astype(jnp.float32)
    k = qkv[:, :, 1].transpose(0, 2, 1, 3).astype(jnp.float32)
    v = qkv[:, :, 2].transpose(0, 2, 1, 3).astype(jnp.float32)
    s = jnp.einsum("bhqd,bhkd->bhqk", q, k) / math.sqrt(D)
    p = jax.nn.softmax(s, axis=-1)
    o = jnp.einsum("bhqk,bhkd->bhqd", p, v)
    o = o.transpose(0, 2, 1, 3).reshape(B, S, E).astype(jnp.float32)
    return o @ params["out_w"] + params["out_b"]


if __name__ == "__main__":
    B, S, E, H = 2, 8, 32, 4

    key = jax.random.PRNGKey(0)
    k_x, k_p = jax.random.split(key)
    x = jax.random.normal(k_x, (B, S, E), dtype=jnp.float32)
    params = init_params(k_p, E)
    prepped = prepare_params(params, H)   # one-time weight prep (outside the forward)

    out, attn_weights = flash_transformer_self_attention(x, prepped, H)
    out = jax.block_until_ready(out)

    assert out.shape == (B, S, E), out.shape
    assert out.dtype == jnp.float32, out.dtype
    assert attn_weights is None

    ref = reference(x, params, H)
    # Half-precision (bf16) attention / matmul path -> loose tolerance.
    err = float(jnp.max(jnp.abs(out - ref)))
    assert err < 5e-2, err

    print("KERNEL_OK")
</pallas_src>

<mosaic_0001>
module attributes {stable_mosaic.version = 11 : i64} {
  func.func @_qkv_proj_kernel(%arg0: i32, %arg1: i32, %arg2: i32, %arg3: i32, %arg4: memref<1x8x32xbf16, #tpu.memory_space<vmem>>, %arg5: memref<32x32xbf16, #tpu.memory_space<vmem>>, %arg6: memref<32x32xbf16, #tpu.memory_space<vmem>>, %arg7: memref<32x32xbf16, #tpu.memory_space<vmem>>, %arg8: memref<1x32xf32, #tpu.memory_space<vmem>>, %arg9: memref<1x32xf32, #tpu.memory_space<vmem>>, %arg10: memref<1x32xf32, #tpu.memory_space<vmem>>, %arg11: memref<1x4x8x8xbf16, #tpu.memory_space<vmem>>, %arg12: memref<1x4x8x8xbf16, #tpu.memory_space<vmem>>, %arg13: memref<1x4x8x8xbf16, #tpu.memory_space<vmem>>, %arg14: memref<8x32xf32, #tpu.memory_space<vmem>>, %arg15: memref<8x32xf32, #tpu.memory_space<vmem>>, %arg16: memref<8x32xf32, #tpu.memory_space<vmem>>) attributes {dimension_semantics = [#tpu.dimension_semantics<parallel>, #tpu.dimension_semantics<parallel>, #tpu.dimension_semantics<parallel>, #tpu.dimension_semantics<arbitrary>], iteration_bounds = array<i64: 2, 1, 1, 1>, scalar_prefetch = 0 : i64, scratch_operands = 3 : i64, tpu.core_type = #tpu.core_type<tc>, window_params = [{transform_indices = @transform_0, window_bounds = array<i64: 1, 8, 32>}, {transform_indices = @transform_1, window_bounds = array<i64: 32, 32>}, {transform_indices = @transform_2, window_bounds = array<i64: 32, 32>}, {transform_indices = @transform_3, window_bounds = array<i64: 32, 32>}, {transform_indices = @transform_4, window_bounds = array<i64: 1, 32>}, {transform_indices = @transform_5, window_bounds = array<i64: 1, 32>}, {transform_indices = @transform_6, window_bounds = array<i64: 1, 32>}, {transform_indices = @transform_7, window_bounds = array<i64: 1, 4, 8, 8>}, {transform_indices = @transform_8, window_bounds = array<i64: 1, 4, 8, 8>}, {transform_indices = @transform_9, window_bounds = array<i64: 1, 4, 8, 8>}]} {
    %c0_i32 = arith.constant 0 : i32
    %0 = arith.cmpi eq, %arg3, %c0_i32 : i32
    %1 = arith.extui %0 : i1 to i32
    %c0_i32_0 = arith.constant 0 : i32
    %2 = arith.cmpi ne, %1, %c0_i32_0 : i32
    scf.if %2 {
      %cst_25 = arith.constant 0.000000e+00 : f32
      %23 = vector.broadcast %cst_25 : f32 to vector<8x32xf32>
      %c0_26 = arith.constant 0 : index
      %c0_27 = arith.constant 0 : index
      %24 = vector.load %arg14[%c0_26, %c0_27] : memref<8x32xf32, #tpu.memory_space<vmem>>, vector<8x32xf32>
      tpu.vector_store %arg14[%c0_26, %c0_27], %23 {strides = array<i32>} : memref<8x32xf32, #tpu.memory_space<vmem>>, vector<8x32xf32>,
      %cst_28 = arith.constant 0.000000e+00 : f32
      %25 = vector.broadcast %cst_28 : f32 to vector<8x32xf32>
      %c0_29 = arith.constant 0 : index
      %c0_30 = arith.constant 0 : index
      %26 = vector.load %arg15[%c0_29, %c0_30] : memref<8x32xf32, #tpu.memory_space<vmem>>, vector<8x32xf32>
      tpu.vector_store %arg15[%c0_29, %c0_30], %25 {strides = array<i32>} : memref<8x32xf32, #tpu.memory_space<vmem>>, vector<8x32xf32>,
      %cst_31 = arith.constant 0.000000e+00 : f32
      %27 = vector.broadcast %cst_31 : f32 to vector<8x32xf32>
      %c0_32 = arith.constant 0 : index
      %c0_33 = arith.constant 0 : index
      %28 = vector.load %arg16[%c0_32, %c0_33] : memref<8x32xf32, #tpu.memory_space<vmem>>, vector<8x32xf32>
      tpu.vector_store %arg16[%c0_32, %c0_33], %27 {strides = array<i32>} : memref<8x32xf32, #tpu.memory_space<vmem>>, vector<8x32xf32>,
    } else {
    }
    %c0 = arith.constant 0 : index
    %c0_1 = arith.constant 0 : index
    %c0_2 = arith.constant 0 : index
    %3 = vector.load %arg4[%c0, %c0_1, %c0_2] : memref<1x8x32xbf16, #tpu.memory_space<vmem>>, vector<1x8x32xbf16>
    %4 = vector.shape_cast %3 : vector<1x8x32xbf16> to vector<8x32xbf16>
    %c0_3 = arith.constant 0 : index
    %c0_4 = arith.constant 0 : index
    %5 = vector.load %arg14[%c0_3, %c0_4] : memref<8x32xf32, #tpu.memory_space<vmem>>, vector<8x32xf32>
    %c0_5 = arith.constant 0 : index
    %c0_6 = arith.constant 0 : index
    %6 = vector.load %arg5[%c0_5, %c0_6] : memref<32x32xbf16, #tpu.memory_space<vmem>>, vector<32x32xbf16>
    %cst = arith.constant dense<0.000000e+00> : vector<8x32xf32>
    %7 = tpu.matmul %4, %6, %cst {dimension_numbers = #tpu.dot_dimension_numbers<[1], [0], [0], [1], [0, 0, 1, 1], [], []>} : vector<8x32xbf16>, vector<32x32xbf16>, vector<8x32xf32> -> vector<8x32xf32>
    %8 = arith.addf %5, %7 : vector<8x32xf32>
    %c0_7 = arith.constant 0 : index
    %c0_8 = arith.constant 0 : index
    %9 = vector.load %arg14[%c0_7, %c0_8] : memref<8x32xf32, #tpu.memory_space<vmem>>, vector<8x32xf32>
    tpu.vector_store %arg14[%c0_7, %c0_8], %8 {strides = array<i32>} : memref<8x32xf32, #tpu.memory_space<vmem>>, vector<8x32xf32>,
    %c0_9 = arith.constant 0 : index
    %c0_10 = arith.constant 0 : index
    %10 = vector.load %arg15[%c0_9, %c0_10] : memref<8x32xf32, #tpu.memory_space<vmem>>, vector<8x32xf32>
    %c0_11 = arith.constant 0 : index
    %c0_12 = arith.constant 0 : index
    %11 = vector.load %arg6[%c0_11, %c0_12] : memref<32x32xbf16, #tpu.memory_space<vmem>>, vector<32x32xbf16>
    %cst_13 = arith.constant dense<0.000000e+00> : vector<8x32xf32>
    %12 = tpu.matmul %4, %11, %cst_13 {dimension_numbers = #tpu.dot_dimension_numbers<[1], [0], [0], [1], [0, 0, 1, 1], [], []>} : vector<8x32xbf16>, vector<32x32xbf16>, vector<8x32xf32> -> vector<8x32xf32>
    %13 = arith.addf %10, %12 : vector<8x32xf32>
    %c0_14 = arith.constant 0 : index
    %c0_15 = arith.constant 0 : index
    %14 = vector.load %arg15[%c0_14, %c0_15] : memref<8x32xf32, #tpu.memory_space<vmem>>, vector<8x32xf32>
    tpu.vector_store %arg15[%c0_14, %c0_15], %13 {strides = array<i32>} : memref<8x32xf32, #tpu.memory_space<vmem>>, vector<8x32xf32>,
    %c0_16 = arith.constant 0 : index
    %c0_17 = arith.constant 0 : index
    %15 = vector.load %arg16[%c0_16, %c0_17] : memref<8x32xf32, #tpu.memory_space<vmem>>, vector<8x32xf32>
    %c0_18 = arith.constant 0 : index
    %c0_19 = arith.constant 0 : index
    %16 = vector.load %arg7[%c0_18, %c0_19] : memref<32x32xbf16, #tpu.memory_space<vmem>>, vector<32x32xbf16>
    %cst_20 = arith.constant dense<0.000000e+00> : vector<8x32xf32>
    %17 = tpu.matmul %4, %16, %cst_20 {dimension_numbers = #tpu.dot_dimension_numbers<[1], [0], [0], [1], [0, 0, 1, 1], [], []>} : vector<8x32xbf16>, vector<32x32xbf16>, vector<8x32xf32> -> vector<8x32xf32>
    %18 = arith.addf %15, %17 : vector<8x32xf32>
    %c0_21 = arith.constant 0 : index
    %c0_22 = arith.constant 0 : index
    %19 = vector.load %arg16[%c0_21, %c0_22] : memref<8x32xf32, #tpu.memory_space<vmem>>, vector<8x32xf32>
    tpu.vector_store %arg16[%c0_21, %c0_22], %18 {strides = array<i32>} : memref<8x32xf32, #tpu.memory_space<vmem>>, vector<8x32xf32>,
    %c0_i32_23 = arith.constant 0 : i32
    %20 = arith.cmpi eq, %arg3, %c0_i32_23 : i32
    %21 = arith.extui %20 : i1 to i32
    %c0_i32_24 = arith.constant 0 : i32
    %22 = arith.cmpi ne, %21, %c0_i32_24 : i32
    scf.if %22 {
      %c0_25 = arith.constant 0 : index
      %c0_26 = arith.constant 0 : index
      %23 = vector.load %arg14[%c0_25, %c0_26] : memref<8x32xf32, #tpu.memory_space<vmem>>, vector<8x8xf32>
      %c0_27 = arith.constant 0 : index
      %c0_28 = arith.constant 0 : index
      %24 = vector.load %arg8[%c0_27, %c0_28] : memref<1x32xf32, #tpu.memory_space<vmem>>, vector<1x8xf32>
      %25 = vector.shape_cast %24 : vector<1x8xf32> to vector<8xf32>
      %26 = vector.shape_cast %25 : vector<8xf32> to vector<1x8xf32>
      %27 = vector.broadcast %26 : vector<1x8xf32> to vector<8x8xf32>
      %28 = arith.addf %23, %27 : vector<8x8xf32>
      %29 = arith.truncf %28 : vector<8x8xf32> to vector<8x8xbf16>
      %c0_29 = arith.constant 0 : index
      %c0_30 = arith.constant 0 : index
      %c0_31 = arith.constant 0 : index
      %c0_32 = arith.constant 0 : index
      %30 = vector.load %arg11[%c0_29, %c0_30, %c0_31, %c0_32] : memref<1x4x8x8xbf16, #tpu.memory_space<vmem>>, vector<1x1x8x8xbf16>
      %31 = vector.shape_cast %30 : vector<1x1x8x8xbf16> to vector<8x8xbf16>
      %32 = vector.shape_cast %29 : vector<8x8xbf16> to vector<1x1x8x8xbf16>
      tpu.vector_store %arg11[%c0_29, %c0_30, %c0_31, %c0_32], %32 {strides = array<i32>} : memref<1x4x8x8xbf16, #tpu.memory_space<vmem>>, vector<1x1x8x8xbf16>,
      %c0_33 = arith.constant 0 : index
      %c0_34 = arith.constant 0 : index
      %33 = vector.load %arg15[%c0_33, %c0_34] : memref<8x32xf32, #tpu.memory_space<vmem>>, vector<8x8xf32>
      %c0_35 = arith.constant 0 : index
      %c0_36 = arith.constant 0 : index
      %34 = vector.load %arg9[%c0_35, %c0_36] : memref<1x32xf32, #tpu.memory_space<vmem>>, vector<1x8xf32>
      %35 = vector.shape_cast %34 : vector<1x8xf32> to vector<8xf32>
      %36 = vector.shape_cast %35 : vector<8xf32> to vector<1x8xf32>
      %37 = vector.broadcast %36 : vector<1x8xf32> to vector<8x8xf32>
      %38 = arith.addf %33, %37 : vector<8x8xf32>
      %39 = arith.truncf %38 : vector<8x8xf32> to vector<8x8xbf16>
      %c0_37 = arith.constant 0 : index
      %c0_38 = arith.constant 0 : index
      %c0_39 = arith.constant 0 : index
      %c0_40 = arith.constant 0 : index
      %40 = vector.load %arg12[%c0_37, %c0_38, %c0_39, %c0_40] : memref<1x4x8x8xbf16, #tpu.memory_space<vmem>>, vector<1x1x8x8xbf16>
      %41 = vector.shape_cast %40 : vector<1x1x8x8xbf16> to vector<8x8xbf16>
      %42 = vector.shape_cast %39 : vector<8x8xbf16> to vector<1x1x8x8xbf16>
      tpu.vector_store %arg12[%c0_37, %c0_38, %c0_39, %c0_40], %42 {strides = array<i32>} : memref<1x4x8x8xbf16, #tpu.memory_space<vmem>>, vector<1x1x8x8xbf16>,
      %c0_41 = arith.constant 0 : index
      %c0_42 = arith.constant 0 : index
      %43 = vector.load %arg16[%c0_41, %c0_42] : memref<8x32xf32, #tpu.memory_space<vmem>>, vector<8x8xf32>
      %c0_43 = arith.constant 0 : index
      %c0_44 = arith.constant 0 : index
      %44 = vector.load %arg10[%c0_43, %c0_44] : memref<1x32xf32, #tpu.memory_space<vmem>>, vector<1x8xf32>
      %45 = vector.shape_cast %44 : vector<1x8xf32> to vector<8xf32>
      %46 = vector.shape_cast %45 : vector<8xf32> to vector<1x8xf32>
      %47 = vector.broadcast %46 : vector<1x8xf32> to vector<8x8xf32>
      %48 = arith.addf %43, %47 : vector<8x8xf32>
      %49 = arith.truncf %48 : vector<8x8xf32> to vector<8x8xbf16>
      %c0_45 = arith.constant 0 : index
      %c0_46 = arith.constant 0 : index
      %c0_47 = arith.constant 0 : index
      %c0_48 = arith.constant 0 : index
      %50 = vector.load %arg13[%c0_45, %c0_46, %c0_47, %c0_48] : memref<1x4x8x8xbf16, #tpu.memory_space<vmem>>, vector<1x1x8x8xbf16>
      %51 = vector.shape_cast %50 : vector<1x1x8x8xbf16> to vector<8x8xbf16>
      %52 = vector.shape_cast %49 : vector<8x8xbf16> to vector<1x1x8x8xbf16>
      tpu.vector_store %arg13[%c0_45, %c0_46, %c0_47, %c0_48], %52 {strides = array<i32>} : memref<1x4x8x8xbf16, #tpu.memory_space<vmem>>, vector<1x1x8x8xbf16>,
      %c0_49 = arith.constant 0 : index
      %c8 = arith.constant 8 : index
      %53 = vector.load %arg14[%c0_49, %c8] : memref<8x32xf32, #tpu.memory_space<vmem>>, vector<8x8xf32>
      %c0_50 = arith.constant 0 : index
      %c8_51 = arith.constant 8 : index
      %54 = vector.load %arg8[%c0_50, %c8_51] : memref<1x32xf32, #tpu.memory_space<vmem>>, vector<1x8xf32>
      %55 = vector.shape_cast %54 : vector<1x8xf32> to vector<8xf32>
      %56 = vector.shape_cast %55 : vector<8xf32> to vector<1x8xf32>
      %57 = vector.broadcast %56 : vector<1x8xf32> to vector<8x8xf32>
      %58 = arith.addf %53, %57 : vector<8x8xf32>
      %59 = arith.truncf %58 : vector<8x8xf32> to vector<8x8xbf16>
      %c0_52 = arith.constant 0 : index
      %c1 = arith.constant 1 : index
      %c0_53 = arith.constant 0 : index
      %c0_54 = arith.constant 0 : index
      %60 = vector.load %arg11[%c0_52, %c1, %c0_53, %c0_54] : memref<1x4x8x8xbf16, #tpu.memory_space<vmem>>, vector<1x1x8x8xbf16>
      %61 = vector.shape_cast %60 : vector<1x1x8x8xbf16> to vector<8x8xbf16>
      %62 = vector.shape_cast %59 : vector<8x8xbf16> to vector<1x1x8x8xbf16>
      tpu.vector_store %arg11[%c0_52, %c1, %c0_53, %c0_54], %62 {strides = array<i32>} : memref<1x4x8x8xbf16, #tpu.memory_space<vmem>>, vector<1x1x8x8xbf16>,
      %c0_55 = arith.constant 0 : index
      %c8_56 = arith.constant 8 : index
      %63 = vector.load %arg15[%c0_55, %c8_56] : memref<8x32xf32, #tpu.memory_space<vmem>>, vector<8x8xf32>
      %c0_57 = arith.constant 0 : index
      %c8_58 = arith.constant 8 : index
      %64 = vector.load %arg9[%c0_57, %c8_58] : memref<1x32xf32, #tpu.memory_space<vmem>>, vector<1x8xf32>
      %65 = vector.shape_cast %64 : vector<1x8xf32> to vector<8xf32>
      %66 = vector.shape_cast %65 : vector<8xf32> to vector<1x8xf32>
      %67 = vector.broadcast %66 : vector<1x8xf32> to vector<8x8xf32>
      %68 = arith.addf %63, %67 : vector<8x8xf32>
      %69 = arith.truncf %68 : vector<8x8xf32> to vector<8x8xbf16>
      %c0_59 = arith.constant 0 : index
      %c1_60 = arith.constant 1 : index
      %c0_61 = arith.constant 0 : index
      %c0_62 = arith.constant 0 : index
      %70 = vector.load %arg12[%c0_59, %c1_60, %c0_61, %c0_62] : memref<1x4x8x8xbf16, #tpu.memory_space<vmem>>, vector<1x1x8x8xbf16>
      %71 = vector.shape_cast %70 : vector<1x1x8x8xbf16> to vector<8x8xbf16>
      %72 = vector.shape_cast %69 : vector<8x8xbf16> to vector<1x1x8x8xbf16>
      tpu.vector_store %arg12[%c0_59, %c1_60, %c0_61, %c0_62], %72 {strides = array<i32>} : memref<1x4x8x8xbf16, #tpu.memory_space<vmem>>, vector<1x1x8x8xbf16>,
      %c0_63 = arith.constant 0 : index
      %c8_64 = arith.constant 8 : index
      %73 = vector.load %arg16[%c0_63, %c8_64] : memref<8x32xf32, #tpu.memory_space<vmem>>, vector<8x8xf32>
      %c0_65 = arith.constant 0 : index
      %c8_66 = arith.constant 8 : index
      %74 = vector.load %arg10[%c0_65, %c8_66] : memref<1x32xf32, #tpu.memory_space<vmem>>, vector<1x8xf32>
      %75 = vector.shape_cast %74 : vector<1x8xf32> to vector<8xf32>
      %76 = vector.shape_cast %75 : vector<8xf32> to vector<1x8xf32>
      %77 = vector.broadcast %76 : vector<1x8xf32> to vector<8x8xf32>
      %78 = arith.addf %73, %77 : vector<8x8xf32>
      %79 = arith.truncf %78 : vector<8x8xf32> to vector<8x8xbf16>
      %c0_67 = arith.constant 0 : index
      %c1_68 = arith.constant 1 : index
      %c0_69 = arith.constant 0 : index
      %c0_70 = arith.constant 0 : index
      %80 = vector.load %arg13[%c0_67, %c1_68, %c0_69, %c0_70] : memref<1x4x8x8xbf16, #tpu.memory_space<vmem>>, vector<1x1x8x8xbf16>
      %81 = vector.shape_cast %80 : vector<1x1x8x8xbf16> to vector<8x8xbf16>
      %82 = vector.shape_cast %79 : vector<8x8xbf16> to vector<1x1x8x8xbf16>
      tpu.vector_store %arg13[%c0_67, %c1_68, %c0_69, %c0_70], %82 {strides = array<i32>} : memref<1x4x8x8xbf16, #tpu.memory_space<vmem>>, vector<1x1x8x8xbf16>,
      %c0_71 = arith.constant 0 : index
      %c16 = arith.constant 16 : index
      %83 = vector.load %arg14[%c0_71, %c16] : memref<8x32xf32, #tpu.memory_space<vmem>>, vector<8x8xf32>
      %c0_72 = arith.constant 0 : index
      %c16_73 = arith.constant 16 : index
      %84 = vector.load %arg8[%c0_72, %c16_73] : memref<1x32xf32, #tpu.memory_space<vmem>>, vector<1x8xf32>
      %85 = vector.shape_cast %84 : vector<1x8xf32> to vector<8xf32>
      %86 = vector.shape_cast %85 : vector<8xf32> to vector<1x8xf32>
      %87 = vector.broadcast %86 : vector<1x8xf32> to vector<8x8xf32>
      %88 = arith.addf %83, %87 : vector<8x8xf32>
      %89 = arith.truncf %88 : vector<8x8xf32> to vector<8x8xbf16>
      %c0_74 = arith.constant 0 : index
      %c2 = arith.constant 2 : index
      %c0_75 = arith.constant 0 : index
      %c0_76 = arith.constant 0 : index
      %90 = vector.load %arg11[%c0_74, %c2, %c0_75, %c0_76] : memref<1x4x8x8xbf16, #tpu.memory_space<vmem>>, vector<1x1x8x8xbf16>
      %91 = vector.shape_cast %90 : vector<1x1x8x8xbf16> to vector<8x8xbf16>
      %92 = vector.shape_cast %89 : vector<8x8xbf16> to vector<1x1x8x8xbf16>
      tpu.vector_store %arg11[%c0_74, %c2, %c0_75, %c0_76], %92 {strides = array<i32>} : memref<1x4x8x8xbf16, #tpu.memory_space<vmem>>, vector<1x1x8x8xbf16>,
      %c0_77 = arith.constant 0 : index
      %c16_78 = arith.constant 16 : index
      %93 = vector.load %arg15[%c0_77, %c16_78] : memref<8x32xf32, #tpu.memory_space<vmem>>, vector<8x8xf32>
      %c0_79 = arith.constant 0 : index
      %c16_80 = arith.constant 16 : index
      %94 = vector.load %arg9[%c0_79, %c16_80] : memref<1x32xf32, #tpu.memory_space<vmem>>, vector<1x8xf32>
      %95 = vector.shape_cast %94 : vector<1x8xf32> to vector<8xf32>
      %96 = vector.shape_cast %95 : vector<8xf32> to vector<1x8xf32>
      %97 = vector.broadcast %96 : vector<1x8xf32> to vector<8x8xf32>
      %98 = arith.addf %93, %97 : vector<8x8xf32>
      %99 = arith.truncf %98 : vector<8x8xf32> to vector<8x8xbf16>
      %c0_81 = arith.constant 0 : index
      %c2_82 = arith.constant 2 : index
      %c0_83 = arith.constant 0 : index
      %c0_84 = arith.constant 0 : index
      %100 = vector.load %arg12[%c0_81, %c2_82, %c0_83, %c0_84] : memref<1x4x8x8xbf16, #tpu.memory_space<vmem>>, vector<1x1x8x8xbf16>
      %101 = vector.shape_cast %100 : vector<1x1x8x8xbf16> to vector<8x8xbf16>
      %102 = vector.shape_cast %99 : vector<8x8xbf16> to vector<1x1x8x8xbf16>
      tpu.vector_store %arg12[%c0_81, %c2_82, %c0_83, %c0_84], %102 {strides = array<i32>} : memref<1x4x8x8xbf16, #tpu.memory_space<vmem>>, vector<1x1x8x8xbf16>,
      %c0_85 = arith.constant 0 : index
      %c16_86 = arith.constant 16 : index
      %103 = vector.load %arg16[%c0_85, %c16_86] : memref<8x32xf32, #tpu.memory_space<vmem>>, vector<8x8xf32>
      %c0_87 = arith.constant 0 : index
      %c16_88 = arith.constant 16 : index
      %104 = vector.load %arg10[%c0_87, %c16_88] : memref<1x32xf32, #tpu.memory_space<vmem>>, vector<1x8xf32>
      %105 = vector.shape_cast %104 : vector<1x8xf32> to vector<8xf32>
      %106 = vector.shape_cast %105 : vector<8xf32> to vector<1x8xf32>
      %107 = vector.broadcast %106 : vector<1x8xf32> to vector<8x8xf32>
      %108 = arith.addf %103, %107 : vector<8x8xf32>
      %109 = arith.truncf %108 : vector<8x8xf32> to vector<8x8xbf16>
      %c0_89 = arith.constant 0 : index
      %c2_90 = arith.constant 2 : index
      %c0_91 = arith.constant 0 : index
      %c0_92 = arith.constant 0 : index
      %110 = vector.load %arg13[%c0_89, %c2_90, %c0_91, %c0_92] : memref<1x4x8x8xbf16, #tpu.memory_space<vmem>>, vector<1x1x8x8xbf16>
      %111 = vector.shape_cast %110 : vector<1x1x8x8xbf16> to vector<8x8xbf16>
      %112 = vector.shape_cast %109 : vector<8x8xbf16> to vector<1x1x8x8xbf16>
      tpu.vector_store %arg13[%c0_89, %c2_90, %c0_91, %c0_92], %112 {strides = array<i32>} : memref<1x4x8x8xbf16, #tpu.memory_space<vmem>>, vector<1x1x8x8xbf16>,
      %c0_93 = arith.constant 0 : index
      %c24 = arith.constant 24 : index
      %113 = vector.load %arg14[%c0_93, %c24] : memref<8x32xf32, #tpu.memory_space<vmem>>, vector<8x8xf32>
      %c0_94 = arith.constant 0 : index
      %c24_95 = arith.constant 24 : index
      %114 = vector.load %arg8[%c0_94, %c24_95] : memref<1x32xf32, #tpu.memory_space<vmem>>, vector<1x8xf32>
      %115 = vector.shape_cast %114 : vector<1x8xf32> to vector<8xf32>
      %116 = vector.shape_cast %115 : vector<8xf32> to vector<1x8xf32>
      %117 = vector.broadcast %116 : vector<1x8xf32> to vector<8x8xf32>
      %118 = arith.addf %113, %117 : vector<8x8xf32>
      %119 = arith.truncf %118 : vector<8x8xf32> to vector<8x8xbf16>
      %c0_96 = arith.constant 0 : index
      %c3 = arith.constant 3 : index
      %c0_97 = arith.constant 0 : index
      %c0_98 = arith.constant 0 : index
      %120 = vector.load %arg11[%c0_96, %c3, %c0_97, %c0_98] : memref<1x4x8x8xbf16, #tpu.memory_space<vmem>>, vector<1x1x8x8xbf16>
      %121 = vector.shape_cast %120 : vector<1x1x8x8xbf16> to vector<8x8xbf16>
      %122 = vector.shape_cast %119 : vector<8x8xbf16> to vector<1x1x8x8xbf16>
      tpu.vector_store %arg11[%c0_96, %c3, %c0_97, %c0_98], %122 {strides = array<i32>} : memref<1x4x8x8xbf16, #tpu.memory_space<vmem>>, vector<1x1x8x8xbf16>,
      %c0_99 = arith.constant 0 : index
      %c24_100 = arith.constant 24 : index
      %123 = vector.load %arg15[%c0_99, %c24_100] : memref<8x32xf32, #tpu.memory_space<vmem>>, vector<8x8xf32>
      %c0_101 = arith.constant 0 : index
      %c24_102 = arith.constant 24 : index
      %124 = vector.load %arg9[%c0_101, %c24_102] : memref<1x32xf32, #tpu.memory_space<vmem>>, vector<1x8xf32>
      %125 = vector.shape_cast %124 : vector<1x8xf32> to vector<8xf32>
      %126 = vector.shape_cast %125 : vector<8xf32> to vector<1x8xf32>
      %127 = vector.broadcast %126 : vector<1x8xf32> to vector<8x8xf32>
      %128 = arith.addf %123, %127 : vector<8x8xf32>
      %129 = arith.truncf %128 : vector<8x8xf32> to vector<8x8xbf16>
      %c0_103 = arith.constant 0 : index
      %c3_104 = arith.constant 3 : index
      %c0_105 = arith.constant 0 : index
      %c0_106 = arith.constant 0 : index
      %130 = vector.load %arg12[%c0_103, %c3_104, %c0_105, %c0_106] : memref<1x4x8x8xbf16, #tpu.memory_space<vmem>>, vector<1x1x8x8xbf16>
      %131 = vector.shape_cast %130 : vector<1x1x8x8xbf16> to vector<8x8xbf16>
      %132 = vector.shape_cast %129 : vector<8x8xbf16> to vector<1x1x8x8xbf16>
      tpu.vector_store %arg12[%c0_103, %c3_104, %c0_105, %c0_106], %132 {strides = array<i32>} : memref<1x4x8x8xbf16, #tpu.memory_space<vmem>>, vector<1x1x8x8xbf16>,
      %c0_107 = arith.constant 0 : index
      %c24_108 = arith.constant 24 : index
      %133 = vector.load %arg16[%c0_107, %c24_108] : memref<8x32xf32, #tpu.memory_space<vmem>>, vector<8x8xf32>
      %c0_109 = arith.constant 0 : index
      %c24_110 = arith.constant 24 : index
      %134 = vector.load %arg10[%c0_109, %c24_110] : memref<1x32xf32, #tpu.memory_space<vmem>>, vector<1x8xf32>
      %135 = vector.shape_cast %134 : vector<1x8xf32> to vector<8xf32>
      %136 = vector.shape_cast %135 : vector<8xf32> to vector<1x8xf32>
      %137 = vector.broadcast %136 : vector<1x8xf32> to vector<8x8xf32>
      %138 = arith.addf %133, %137 : vector<8x8xf32>
      %139 = arith.truncf %138 : vector<8x8xf32> to vector<8x8xbf16>
      %c0_111 = arith.constant 0 : index
      %c3_112 = arith.constant 3 : index
      %c0_113 = arith.constant 0 : index
      %c0_114 = arith.constant 0 : index
      %140 = vector.load %arg13[%c0_111, %c3_112, %c0_113, %c0_114] : memref<1x4x8x8xbf16, #tpu.memory_space<vmem>>, vector<1x1x8x8xbf16>
      %141 = vector.shape_cast %140 : vector<1x1x8x8xbf16> to vector<8x8xbf16>
      %142 = vector.shape_cast %139 : vector<8x8xbf16> to vector<1x1x8x8xbf16>
      tpu.vector_store %arg13[%c0_111, %c3_112, %c0_113, %c0_114], %142 {strides = array<i32>} : memref<1x4x8x8xbf16, #tpu.memory_space<vmem>>, vector<1x1x8x8xbf16>,
    } else {
    }
    return
  }
  func.func @transform_0(%arg0: i32, %arg1: i32, %arg2: i32, %arg3: i32) -> (i32, i32, i32) {
    %c0_i32 = arith.constant 0 : i32
    return %arg0, %arg1, %arg3 : i32, i32, i32
  }
  func.func @transform_1(%arg0: i32, %arg1: i32, %arg2: i32, %arg3: i32) -> (i32, i32) {
    %c0_i32 = arith.constant 0 : i32
    return %arg3, %arg2 : i32, i32
  }
  func.func @transform_2(%arg0: i32, %arg1: i32, %arg2: i32, %arg3: i32) -> (i32, i32) {
    %c0_i32 = arith.constant 0 : i32
    return %arg3, %arg2 : i32, i32
  }
  func.func @transform_3(%arg0: i32, %arg1: i32, %arg2: i32, %arg3: i32) -> (i32, i32) {
    %c0_i32 = arith.constant 0 : i32
    return %arg3, %arg2 : i32, i32
  }
  func.func @transform_4(%arg0: i32, %arg1: i32, %arg2: i32, %arg3: i32) -> (i32, i32) {
    %c0_i32 = arith.constant 0 : i32
    %c0_i32_0 = arith.constant 0 : i32
    return %c0_i32, %arg2 : i32, i32
  }
  func.func @transform_5(%arg0: i32, %arg1: i32, %arg2: i32, %arg3: i32) -> (i32, i32) {
    %c0_i32 = arith.constant 0 : i32
    %c0_i32_0 = arith.constant 0 : i32
    return %c0_i32, %arg2 : i32, i32
  }
  func.func @transform_6(%arg0: i32, %arg1: i32, %arg2: i32, %arg3: i32) -> (i32, i32) {
    %c0_i32 = arith.constant 0 : i32
    %c0_i32_0 = arith.constant 0 : i32
    return %c0_i32, %arg2 : i32, i32
  }
  func.func @transform_7(%arg0: i32, %arg1: i32, %arg2: i32, %arg3: i32) -> (i32, i32, i32, i32) {
    %c0_i32 = arith.constant 0 : i32
    %c0_i32_0 = arith.constant 0 : i32
    return %arg0, %arg2, %arg1, %c0_i32 : i32, i32, i32, i32
  }
  func.func @transform_8(%arg0: i32, %arg1: i32, %arg2: i32, %arg3: i32) -> (i32, i32, i32, i32) {
    %c0_i32 = arith.constant 0 : i32
    %c0_i32_0 = arith.constant 0 : i32
    return %arg0, %arg2, %arg1, %c0_i32 : i32, i32, i32, i32
  }
  func.func @transform_9(%arg0: i32, %arg1: i32, %arg2: i32, %arg3: i32) -> (i32, i32, i32, i32) {
    %c0_i32 = arith.constant 0 : i32
    %c0_i32_0 = arith.constant 0 : i32
    return %arg0, %arg2, %arg1, %c0_i32 : i32, i32, i32, i32
  }
}

</mosaic_0001>

<llo_original>
// kernel: tpu_custom_call.1
$region0: #{tpu_custom_call.1}
  #allocation0 [shape = 'u32[]', space=smem, size = 0x4, offset = 0x4, fixed_abs, tag = 'smem constant byte address 0x4 - core index']
  #allocation1 [shape = 'u32[144,128]{1,0:T(1,128)}', space=vmem, size = 0x12000, scoped, tag = 'internal scratch']
  #allocation2 [shape = 'f32[8,32]{1,0:T(8,128)}', space=vmem, size = 0x1000, scoped, tag = 'scratch operand']
  #allocation3 [shape = 'f32[8,32]{1,0:T(8,128)}', space=vmem, size = 0x1000, scoped, tag = 'scratch operand']
  #allocation4 [shape = 'f32[8,32]{1,0:T(8,128)}', space=vmem, size = 0x1000, scoped, tag = 'scratch operand']
  %s0 = inlined_call_operand.hbm [shape: bf16[2,8,32], index: 0, kind: input, shape index: {}]
  %s1 = inlined_call_operand.hbm [shape: bf16[32,32], index: 1, kind: input, shape index: {}]
  %s2 = inlined_call_operand.hbm [shape: bf16[32,32], index: 2, kind: input, shape index: {}]
  %s3 = inlined_call_operand.hbm [shape: bf16[32,32], index: 3, kind: input, shape index: {}]
  %s4 = inlined_call_operand.vmem [shape: f32[1,32], index: 4, kind: input, shape index: {}]
  %s5 = inlined_call_operand.vmem [shape: f32[1,32], index: 5, kind: input, shape index: {}]
  %s6 = inlined_call_operand.vmem [shape: f32[1,32], index: 6, kind: input, shape index: {}]
  %s7 = inlined_call_operand.hbm [shape: bf16[2,4,8,8], index: 7, kind: output, shape index: {0}]
  %s8 = inlined_call_operand.hbm [shape: bf16[2,4,8,8], index: 8, kind: output, shape index: {1}]
  %s9 = inlined_call_operand.hbm [shape: bf16[2,4,8,8], index: 9, kind: output, shape index: {2}]
  %10 = xla_tuple %s7, %s8, %s9
  %s11 = sld [smem:[#allocation0]]
  $region101: #{tpu_custom_call.1} parent=0
    _
  %s13 = ssub.s32 1, %s11
  %s14 = scalar_select 0, %s13, %s11
  $region1: #{tpu_custom_call.1} parent=0
    #allocation5 [shape = 'u8[4096]{0}', space=vmem, size = 0x1000, scoped, tag = 'input window, operand 0']
    #allocation6 [shape = 's32[2]{0}', space=sflag, size = 0x8, scoped, tag = 'scoped memory for tpu_custom_call.1']
    #allocation7 [shape = 's32[2]{0}', space=sflag, size = 0x8, scoped, tag = 'scoped memory for tpu_custom_call.1']
    #allocation8 [shape = 'u8[8192]{0}', space=vmem, size = 0x2000, scoped, tag = 'input window, operand 1, single buffered']
    #allocation9 [shape = 's32[1]{0}', space=sflag, size = 0x4, scoped, tag = 'scoped memory for tpu_custom_call.1']
    #allocation10 [shape = 'u8[8192]{0}', space=vmem, size = 0x2000, scoped, tag = 'input window, operand 2, single buffered']
    #allocation11 [shape = 'u8[8192]{0}', space=vmem, size = 0x2000, scoped, tag = 'input window, operand 3, single buffered']
    #allocation12 [shape = 's32[1]{0}', space=sflag, size = 0x4, scoped, tag = 'scoped memory for tpu_custom_call.1']
    #allocation13 [shape = 'u8[16384]{0}', space=vmem, size = 0x4000, scoped, tag = 'output window, operand 0']
    #allocation14 [shape = 'u8[16384]{0}', space=vmem, size = 0x4000, scoped, tag = 'output window, operand 1']
    #allocation15 [shape = 's32[2]{0}', space=sflag, size = 0x8, scoped, tag = 'scoped memory for tpu_custom_call.1']
    #allocation16 [shape = 'u8[16384]{0}', space=vmem, size = 0x4000, scoped, tag = 'output window, operand 2']
    %15 = vsyncpa [#allocation6], 0
    %s16 = scalar_lea.sflag [#allocation6], 1
    %17 = vsyncpa %s16, 0
    %18 = vsyncpa [#allocation9], 0
    %19 = vsyncpa [#allocation12], 0
    %20 = vsyncpa [#allocation7], 0
    %s21 = scalar_lea.sflag [#allocation7], 1
    %22 = vsyncpa %s21, 0
    %23 = vsyncpa [#allocation15], 0
    %s24 = scalar_lea.sflag [#allocation15], 1
    %25 = vsyncpa %s24, 0
    loop: start=0, step=1, limit=4
    $region2: #{tpu_custom_call.1} parent=1 // loop_pre_header
      _
    $region3: #{tpu_custom_call.1} parent=1 // loop_header
      %s27 = sphi 0, %s31
      %p28 = scmp.ge.s32.totalorder %s27, 4
      %s34 = sphi 0, %s60
      %s35 = sphi 0, %s56
      %s36 = sphi 0, %s52
      %s37 = sphi 0, %s48
      %s38 = sphi 0, %s34
      %s39 = sphi 0, %s35
      %s40 = sphi 0, %s36
      %s41 = sphi 0, %s37
      %s42 = sphi 0, %s38
      %s43 = sphi 0, %s39
      %s44 = sphi 0, %s40
      %s45 = sphi 0, %s41
      %s67 = sphi 0, %s69
      %s70 = sphi 0, %s67
      %s71 = sphi 0, %s70
      %s87 = sphi 0, %s71
      %s95 = sphi 0, %s97
      %s98 = sphi 0, %s95
      %s99 = sphi 0, %s98
      %s115 = sphi 0, %s99
      %s123 = sphi 0, %s125
      %s126 = sphi 0, %s123
      %s127 = sphi 0, %s126
      %s143 = sphi 0, %s127
      %s151 = sphi 0, %s153
      %s154 = sphi 0, %s151
      %s155 = sphi 0, %s154
      %s171 = sphi 0, %s155
      %s177 = sphi 0, %s179
      %s180 = sphi 0, %s177
      %s181 = sphi 0, %s180
      %s197 = sphi 0, %s181
      %s203 = sphi 0, %s205
      %s206 = sphi 0, %s203
      %s207 = sphi 0, %s206
      %s223 = sphi 0, %s207
      %s229 = sphi 0, %s231
      %s232 = sphi 0, %s229
      %s233 = sphi 0, %s232
      %s249 = sphi 0, %s233
      %s259 = sphi 0, %s261
      %s262 = sphi 0, %s259
      %s263 = sphi 0, %s262
      %s279 = sphi 0, %s263
      %s289 = sphi 0, %s291
      %s292 = sphi 0, %s289
      %s293 = sphi 0, %s292
      %s309 = sphi 0, %s293
      %s319 = sphi 0, %s321
      %s322 = sphi 0, %s319
      %s323 = sphi 0, %s322
      %s339 = sphi 0, %s323
    $region4: #{tpu_custom_call.1} parent=1 // loop_header_branch
      %30 = sbr.rel (%p28) target = $region8
    $region5: #{tpu_custom_call.1} parent=1 // loop_body
      %s32 = ssub.s32 %s27, 1
      %s33 = ssub.s32 %s27, 2
      %s46 = sadd.s32 1, %s37
      %p47 = scmp.ge.s32.totalorder %s46, 1
      %s48 = scalar_select %p47, 0, %s46
      %s49 = sadd.s32 1, %s36
      %s50 = scalar_select %p47, %s49, %s36
      %p51 = scmp.ge.s32.totalorder %s50, 1
      %s52 = scalar_select %p51, 0, %s50
      %s53 = sadd.s32 1, %s35
      %s54 = scalar_select %p51, %s53, %s35
      %p55 = scmp.ge.s32.totalorder %s54, 1
      %s56 = scalar_select %p55, 0, %s54
      %s57 = sadd.s32 1, %s34
      %s58 = scalar_select %p55, %s57, %s34
      %p59 = scmp.ge.s32.totalorder %s58, 2
      %s60 = scalar_select %p59, 0, %s58
      %s61 = ssub.s32 %s34, %s60
      %s62 = ssub.s32 %s35, %s56
      %s63 = sor.u32 %s61, %s62
      %s64 = ssub.s32 %s37, %s48
      %s65 = sor.u32 %s63, %s64
      %p66 = scmp.eq.s32.totalorder %s65, 0
      %s68 = sadd.s32 %s67, 1
      %s69 = scalar_select %p66, %s67, %s68
      %p72 = pneg %p66
      %p73 = scmp.eq.s32.totalorder %s27, 1
      %p74 = por %p72, %p73
      %p75 = scmp.ne.s32.totalorder %s67, %s70
      %p76 = scmp.eq.s32.totalorder %s27, 0
      %p77 = por %p75, %p76
      %p78 = scmp.ne.s32.totalorder %s67, %s70
      %p79 = scmp.eq.s32.totalorder %s32, 1
      %p80 = por %p78, %p79
      %p81 = scmp.ne.s32.totalorder %s70, %s71
      %p82 = scmp.eq.s32.totalorder %s32, 0
      %p83 = por %p81, %p82
      %p84 = scmp.ne.s32.totalorder %s70, %s71
      %p85 = scmp.eq.s32.totalorder %s33, 1
      %p86 = por %p84, %p85
      %p88 = scmp.ne.s32.totalorder %s71, %s87
      %p89 = scmp.eq.s32.totalorder %s33, 0
      %p90 = por %p88, %p89
      %s91 = ssub.s32 %s37, %s48
      %s92 = ssub.s32 %s36, %s52
      %s93 = sor.u32 %s91, %s92
      %p94 = scmp.eq.s32.totalorder %s93, 0
      %s96 = sadd.s32 %s95, 1
      %s97 = scalar_select %p94, %s95, %s96
      %p100 = pneg %p94
      %p101 = scmp.eq.s32.totalorder %s27, 1
      %p102 = por %p100, %p101
      %p103 = scmp.ne.s32.totalorder %s95, %s98
      %p104 = scmp.eq.s32.totalorder %s27, 0
      %p105 = por %p103, %p104
      %p106 = scmp.ne.s32.totalorder %s95, %s98
      %p107 = scmp.eq.s32.totalorder %s32, 1
      %p108 = por %p106, %p107
      %p109 = scmp.ne.s32.totalorder %s98, %s99
      %p110 = scmp.eq.s32.totalorder %s32, 0
      %p111 = por %p109, %p110
      %p112 = scmp.ne.s32.totalorder %s98, %s99
      %p113 = scmp.eq.s32.totalorder %s33, 1
      %p114 = por %p112, %p113
      %p116 = scmp.ne.s32.totalorder %s99, %s115
      %p117 = scmp.eq.s32.totalorder %s33, 0
      %p118 = por %p116, %p117
      %s119 = ssub.s32 %s37, %s48
      %s120 = ssub.s32 %s36, %s52
      %s121 = sor.u32 %s119, %s120
      %p122 = scmp.eq.s32.totalorder %s121, 0
      %s124 = sadd.s32 %s123, 1
      %s125 = scalar_select %p122, %s123, %s124
      %p128 = pneg %p122
      %p129 = scmp.eq.s32.totalorder %s27, 1
      %p130 = por %p128, %p129
      %p131 = scmp.ne.s32.totalorder %s123, %s126
      %p132 = scmp.eq.s32.totalorder %s27, 0
      %p133 = por %p131, %p132
      %p134 = scmp.ne.s32.totalorder %s123, %s126
      %p135 = scmp.eq.s32.totalorder %s32, 1
      %p136 = por %p134, %p135
      %p137 = scmp.ne.s32.totalorder %s126, %s127
      %p138 = scmp.eq.s32.totalorder %s32, 0
      %p139 = por %p137, %p138
      %p140 = scmp.ne.s32.totalorder %s126, %s127
      %p141 = scmp.eq.s32.totalorder %s33, 1
      %p142 = por %p140, %p141
      %p144 = scmp.ne.s32.totalorder %s127, %s143
      %p145 = scmp.eq.s32.totalorder %s33, 0
      %p146 = por %p144, %p145
      %s147 = ssub.s32 %s37, %s48
      %s148 = ssub.s32 %s36, %s52
      %s149 = sor.u32 %s147, %s148
      %p150 = scmp.eq.s32.totalorder %s149, 0
      %s152 = sadd.s32 %s151, 1
      %s153 = scalar_select %p150, %s151, %s152
      %p156 = pneg %p150
      %p157 = scmp.eq.s32.totalorder %s27, 1
      %p158 = por %p156, %p157
      %p159 = scmp.ne.s32.totalorder %s151, %s154
      %p160 = scmp.eq.s32.totalorder %s27, 0
      %p161 = por %p159, %p160
      %p162 = scmp.ne.s32.totalorder %s151, %s154
      %p163 = scmp.eq.s32.totalorder %s32, 1
      %p164 = por %p162, %p163
      %p165 = scmp.ne.s32.totalorder %s154, %s155
      %p166 = scmp.eq.s32.totalorder %s32, 0
      %p167 = por %p165, %p166
      %p168 = scmp.ne.s32.totalorder %s154, %s155
      %p169 = scmp.eq.s32.totalorder %s33, 1
      %p170 = por %p168, %p169
      %p172 = scmp.ne.s32.totalorder %s155, %s171
      %p173 = scmp.eq.s32.totalorder %s33, 0
      %p174 = por %p172, %p173
      %s175 = ssub.s32 %s36, %s52
      %p176 = scmp.eq.s32.totalorder %s175, 0
      %s178 = sadd.s32 %s177, 1
      %s179 = scalar_select %p176, %s177, %s178
      %p182 = pneg %p176
      %p183 = scmp.eq.s32.totalorder %s27, 1
      %p184 = por %p182, %p183
      %p185 = scmp.ne.s32.totalorder %s177, %s180
      %p186 = scmp.eq.s32.totalorder %s27, 0
      %p187 = por %p185, %p186
      %p188 = scmp.ne.s32.totalorder %s177, %s180
      %p189 = scmp.eq.s32.totalorder %s32, 1
      %p190 = por %p188, %p189
      %p191 = scmp.ne.s32.totalorder %s180, %s181
      %p192 = scmp.eq.s32.totalorder %s32, 0
      %p193 = por %p191, %p192
      %p194 = scmp.ne.s32.totalorder %s180, %s181
      %p195 = scmp.eq.s32.totalorder %s33, 1
      %p196 = por %p194, %p195
      %p198 = scmp.ne.s32.totalorder %s181, %s197
      %p199 = scmp.eq.s32.totalorder %s33, 0
      %p200 = por %p198, %p199
      %s201 = ssub.s32 %s36, %s52
      %p202 = scmp.eq.s32.totalorder %s201, 0
      %s204 = sadd.s32 %s203, 1
      %s205 = scalar_select %p202, %s203, %s204
      %p208 = pneg %p202
      %p209 = scmp.eq.s32.totalorder %s27, 1
      %p210 = por %p208, %p209
      %p211 = scmp.ne.s32.totalorder %s203, %s206
      %p212 = scmp.eq.s32.totalorder %s27, 0
      %p213 = por %p211, %p212
      %p214 = scmp.ne.s32.totalorder %s203, %s206
      %p215 = scmp.eq.s32.totalorder %s32, 1
      %p216 = por %p214, %p215
      %p217 = scmp.ne.s32.totalorder %s206, %s207
      %p218 = scmp.eq.s32.totalorder %s32, 0
      %p219 = por %p217, %p218
      %p220 = scmp.ne.s32.totalorder %s206, %s207
      %p221 = scmp.eq.s32.totalorder %s33, 1
      %p222 = por %p220, %p221
      %p224 = scmp.ne.s32.totalorder %s207, %s223
      %p225 = scmp.eq.s32.totalorder %s33, 0
      %p226 = por %p224, %p225
      %s227 = ssub.s32 %s36, %s52
      %p228 = scmp.eq.s32.totalorder %s227, 0
      %s230 = sadd.s32 %s229, 1
      %s231 = scalar_select %p228, %s229, %s230
      %p234 = pneg %p228
      %p235 = scmp.eq.s32.totalorder %s27, 1
      %p236 = por %p234, %p235
      %p237 = scmp.ne.s32.totalorder %s229, %s232
      %p238 = scmp.eq.s32.totalorder %s27, 0
      %p239 = por %p237, %p238
      %p240 = scmp.ne.s32.totalorder %s229, %s232
      %p241 = scmp.eq.s32.totalorder %s32, 1
      %p242 = por %p240, %p241
      %p243 = scmp.ne.s32.totalorder %s232, %s233
      %p244 = scmp.eq.s32.totalorder %s32, 0
      %p245 = por %p243, %p244
      %p246 = scmp.ne.s32.totalorder %s232, %s233
      %p247 = scmp.eq.s32.totalorder %s33, 1
      %p248 = por %p246, %p247
      %p250 = scmp.ne.s32.totalorder %s233, %s249
      %p251 = scmp.eq.s32.totalorder %s33, 0
      %p252 = por %p250, %p251
      %s253 = ssub.s32 %s34, %s60
      %s254 = ssub.s32 %s36, %s52
      %s255 = sor.u32 %s253, %s254
      %s256 = ssub.s32 %s35, %s56
      %s257 = sor.u32 %s255, %s256
      %p258 = scmp.eq.s32.totalorder %s257, 0
      %s260 = sadd.s32 %s259, 1
      %s261 = scalar_select %p258, %s259, %s260
      %p264 = pneg %p258
      %p265 = scmp.eq.s32.totalorder %s27, 1
      %p266 = por %p264, %p265
      %p267 = scmp.ne.s32.totalorder %s259, %s262
      %p268 = scmp.eq.s32.totalorder %s27, 0
      %p269 = por %p267, %p268
      %p270 = scmp.ne.s32.totalorder %s259, %s262
      %p271 = scmp.eq.s32.totalorder %s32, 1
      %p272 = por %p270, %p271
      %p273 = scmp.ne.s32.totalorder %s262, %s263
      %p274 = scmp.eq.s32.totalorder %s32, 0
      %p275 = por %p273, %p274
      %p276 = scmp.ne.s32.totalorder %s262, %s263
      %p277 = scmp.eq.s32.totalorder %s33, 1
      %p278 = por %p276, %p277
      %p280 = scmp.ne.s32.totalorder %s263, %s279
      %p281 = scmp.eq.s32.totalorder %s33, 0
      %p282 = por %p280, %p281
      %s283 = ssub.s32 %s34, %s60
      %s284 = ssub.s32 %s36, %s52
      %s285 = sor.u32 %s283, %s284
      %s286 = ssub.s32 %s35, %s56
      %s287 = sor.u32 %s285, %s286
      %p288 = scmp.eq.s32.totalorder %s287, 0
      %s290 = sadd.s32 %s289, 1
      %s291 = scalar_select %p288, %s289, %s290
      %p294 = pneg %p288
      %p295 = scmp.eq.s32.totalorder %s27, 1
      %p296 = por %p294, %p295
      %p297 = scmp.ne.s32.totalorder %s289, %s292
      %p298 = scmp.eq.s32.totalorder %s27, 0
      %p299 = por %p297, %p298
      %p300 = scmp.ne.s32.totalorder %s289, %s292
      %p301 = scmp.eq.s32.totalorder %s32, 1
      %p302 = por %p300, %p301
      %p303 = scmp.ne.s32.totalorder %s292, %s293
      %p304 = scmp.eq.s32.totalorder %s32, 0
      %p305 = por %p303, %p304
      %p306 = scmp.ne.s32.totalorder %s292, %s293
      %p307 = scmp.eq.s32.totalorder %s33, 1
      %p308 = por %p306, %p307
      %p310 = scmp.ne.s32.totalorder %s293, %s309
      %p311 = scmp.eq.s32.totalorder %s33, 0
      %p312 = por %p310, %p311
      %s313 = ssub.s32 %s34, %s60
      %s314 = ssub.s32 %s36, %s52
      %s315 = sor.u32 %s313, %s314
      %s316 = ssub.s32 %s35, %s56
      %s317 = sor.u32 %s315, %s316
      %p318 = scmp.eq.s32.totalorder %s317, 0
      %s320 = sadd.s32 %s319, 1
      %s321 = scalar_select %p318, %s319, %s320
      %p324 = pneg %p318
      %p325 = scmp.eq.s32.totalorder %s27, 1
      %p326 = por %p324, %p325
      %p327 = scmp.ne.s32.totalorder %s319, %s322
      %p328 = scmp.eq.s32.totalorder %s27, 0
      %p329 = por %p327, %p328
      %p330 = scmp.ne.s32.totalorder %s319, %s322
      %p331 = scmp.eq.s32.totalorder %s32, 1
      %p332 = por %p330, %p331
      %p333 = scmp.ne.s32.totalorder %s322, %s323
      %p334 = scmp.eq.s32.totalorder %s32, 0
      %p335 = por %p333, %p334
      %p336 = scmp.ne.s32.totalorder %s322, %s323
      %p337 = scmp.eq.s32.totalorder %s33, 1
      %p338 = por %p336, %p337
      %p340 = scmp.ne.s32.totalorder %s323, %s339
      %p341 = scmp.eq.s32.totalorder %s33, 0
      %p342 = por %p340, %p341
      %p343 = scmp.le.s32.totalorder 1, %s27
      %p344 = scmp.lt.s32.totalorder %s27, 3
      %p345 = pnand %p343, %p344
      %p346 = pneg %p345
      // Predicated region
      $region9: #{tpu_custom_call.1} parent=5 // pred_check
        _
      $region10: #{tpu_custom_call.1} parent=5 // pred_check_branch
        %348 = sbr.rel (%p345) target = $region12
      $region11: #{tpu_custom_call.1} parent=5 // pred_region
        %s349 = ssub.s32 %s27, 1
        // Predicated region
        $region13: #{tpu_custom_call.1} parent=11 // pred_check
          %p350 = pneg %p111
        $region14: #{tpu_custom_call.1} parent=11 // pred_check_branch
          %352 = sbr.rel (%p350) target = $region16
        $region15: #{tpu_custom_call.1} parent=11 // pred_region
          %s353 = smul.u32 4, %s41
          %s355 = ssub.s32 256, 256
          %356 = vsyncadd [#allocation9], %s355
          %s357 = sadd.s32 %s40, %s353
          %s358 = smul.addr %s357, 64
          %s359 = scalar_lea.hbm %s1, %s358
          %s360 = sshll.u32 [#allocation8], 4
          %s361 = int_to_ptr.vmem [resolvable:$true] %s360
          %366 = dma.hbm_to_vmem [thread:$0]  %s359, 256, %s361, [#allocation9], 64, 64, 4
        $region16: #{tpu_custom_call.1} parent=11 // pred_fallthru
          _
        // Predicated region
        $region17: #{tpu_custom_call.1} parent=11 // pred_check
          %p367 = pneg %p139
        $region18: #{tpu_custom_call.1} parent=11 // pred_check_branch
          %369 = sbr.rel (%p367) target = $region20
        $region19: #{tpu_custom_call.1} parent=11 // pred_region
          %s370 = smul.u32 4, %s41
          %s372 = ssub.s32 256, 256
          %373 = vsyncadd [#allocation9], %s372
          %s374 = sadd.s32 %s40, %s370
          %s375 = smul.addr %s374, 64
          %s376 = scalar_lea.hbm %s2, %s375
          %s377 = sshll.u32 [#allocation10], 4
          %s378 = int_to_ptr.vmem [resolvable:$true] %s377
          %383 = dma.hbm_to_vmem [thread:$0]  %s376, 256, %s378, [#allocation9], 64, 64, 4
        $region20: #{tpu_custom_call.1} parent=11 // pred_fallthru
          _
        // Predicated region
        $region21: #{tpu_custom_call.1} parent=11 // pred_check
          %p384 = pneg %p167
        $region22: #{tpu_custom_call.1} parent=11 // pred_check_branch
          %386 = sbr.rel (%p384) target = $region24
        $region23: #{tpu_custom_call.1} parent=11 // pred_region
          %s387 = smul.u32 4, %s41
          %s389 = ssub.s32 256, 256
          %390 = vsyncadd [#allocation12], %s389
          %s391 = sadd.s32 %s40, %s387
          %s392 = smul.addr %s391, 64
          %s393 = scalar_lea.hbm %s3, %s392
          %s394 = sshll.u32 [#allocation11], 4
          %s395 = int_to_ptr.vmem [resolvable:$true] %s394
          %400 = dma.hbm_to_vmem [thread:$0]  %s393, 256, %s395, [#allocation12], 64, 64, 4
        $region24: #{tpu_custom_call.1} parent=11 // pred_fallthru
          _
        // Predicated region
        $region25: #{tpu_custom_call.1} parent=11 // pred_check
          %p401 = pneg %p193
        $region26: #{tpu_custom_call.1} parent=11 // pred_check_branch
          %403 = sbr.rel (%p401) target = $region28
        $region27: #{tpu_custom_call.1} parent=11 // pred_region
          %p404 = scmp.lt.s32.totalorder %s40, 0
          %s405 = scalar_select %p404, %s40, 0
          %s406 = scalar_lea.vmem %s4, %s405
        $region28: #{tpu_custom_call.1} parent=11 // pred_fallthru
          _
        // Predicated region
        $region29: #{tpu_custom_call.1} parent=11 // pred_check
          %p407 = pneg %p219
        $region30: #{tpu_custom_call.1} parent=11 // pred_check_branch
          %409 = sbr.rel (%p407) target = $region32
        $region31: #{tpu_custom_call.1} parent=11 // pred_region
          %p410 = scmp.lt.s32.totalorder %s40, 0
          %s411 = scalar_select %p410, %s40, 0
          %s412 = scalar_lea.vmem %s5, %s411
        $region32: #{tpu_custom_call.1} parent=11 // pred_fallthru
          _
        // Predicated region
        $region33: #{tpu_custom_call.1} parent=11 // pred_check
          %p413 = pneg %p245
        $region34: #{tpu_custom_call.1} parent=11 // pred_check_branch
          %415 = sbr.rel (%p413) target = $region36
        $region35: #{tpu_custom_call.1} parent=11 // pred_region
          %p416 = scmp.lt.s32.totalorder %s40, 0
          %s417 = scalar_select %p416, %s40, 0
          %s418 = scalar_lea.vmem %s6, %s417
        $region36: #{tpu_custom_call.1} parent=11 // pred_fallthru
          _
      $region12: #{tpu_custom_call.1} parent=5 // pred_fallthru
        _
      %p419 = scmp.lt.s32.totalorder %s27, 2
      // Predicated region
      $region37: #{tpu_custom_call.1} parent=5 // pred_check
        %p420 = pneg %p419
      $region38: #{tpu_custom_call.1} parent=5 // pred_check_branch
        %422 = sbr.rel (%p420) target = $region40
      $region39: #{tpu_custom_call.1} parent=5 // pred_region
        // Predicated region
        $region41: #{tpu_custom_call.1} parent=39 // pred_check
          %p423 = pneg %p77
        $region42: #{tpu_custom_call.1} parent=39 // pred_check_branch
          %425 = sbr.rel (%p423) target = $region44
        $region43: #{tpu_custom_call.1} parent=39 // pred_region
          %s426 = sand.u32 %s67, 1
          %s427 = scalar_lea.sflag [#allocation6], %s426
          %s428 = sand.u32 %s67, 1
          %s429 = smul.addr %s428, 4
          %s430 = scalar_lea.vmem [#allocation5], %s429
          %s432 = ssub.s32 64, 64
          %433 = vsyncadd %s427, %s432
          %s434 = sadd.s32 %s37, %s35
          %s435 = sadd.s32 %s434, %s34
          %s436 = smul.addr %s435, 64
          %s437 = scalar_lea.hbm %s0, %s436
          %s439 = sshll.u32 %s430, 4
          %s440 = int_to_ptr.vmem [resolvable:$true] %s439
          %442 = dma.hbm_to_vmem [thread:$0]  %s437, 64, %s440, %s427
        $region44: #{tpu_custom_call.1} parent=39 // pred_fallthru
          _
      $region40: #{tpu_custom_call.1} parent=5 // pred_fallthru
        _
      %p443 = scmp.le.s32.totalorder 1, %s27
      %p444 = scmp.lt.s32.totalorder %s27, 3
      %p445 = pnand %p443, %p444
      %p446 = pneg %p445
      // Predicated region
      $region45: #{tpu_custom_call.1} parent=5 // pred_check
        _
      $region46: #{tpu_custom_call.1} parent=5 // pred_check_branch
        %448 = sbr.rel (%p445) target = $region48
      $region47: #{tpu_custom_call.1} parent=5 // pred_region
        %s449 = ssub.s32 %s27, 1
        %s450 = sand.u32 %s70, 1
        %s451 = scalar_lea.sflag [#allocation6], %s450
        %s452 = sand.u32 %s70, 1
        %s453 = smul.addr %s452, 4
        %s454 = scalar_lea.vmem [#allocation5], %s453
        // Predicated region
        $region49: #{tpu_custom_call.1} parent=47 // pred_check
          %p455 = pneg %p83
        $region50: #{tpu_custom_call.1} parent=47 // pred_check_branch
          %457 = sbr.rel (%p455) target = $region52
        $region51: #{tpu_custom_call.1} parent=47 // pred_region
          %458 = dma.done %s451, 64
        $region52: #{tpu_custom_call.1} parent=47 // pred_fallthru
          _
        // Predicated region
        $region53: #{tpu_custom_call.1} parent=47 // pred_check
          %p459 = pneg %p111
        $region54: #{tpu_custom_call.1} parent=47 // pred_check_branch
          %461 = sbr.rel (%p459) target = $region56
        $region55: #{tpu_custom_call.1} parent=47 // pred_region
          %462 = dma.done [#allocation9], 256
        $region56: #{tpu_custom_call.1} parent=47 // pred_fallthru
          _
        // Predicated region
        $region57: #{tpu_custom_call.1} parent=47 // pred_check
          %p463 = pneg %p139
        $region58: #{tpu_custom_call.1} parent=47 // pred_check_branch
          %465 = sbr.rel (%p463) target = $region60
        $region59: #{tpu_custom_call.1} parent=47 // pred_region
          %466 = dma.done [#allocation9], 256
        $region60: #{tpu_custom_call.1} parent=47 // pred_fallthru
          _
        // Predicated region
        $region61: #{tpu_custom_call.1} parent=47 // pred_check
          %p467 = pneg %p167
        $region62: #{tpu_custom_call.1} parent=47 // pred_check_branch
          %469 = sbr.rel (%p467) target = $region64
        $region63: #{tpu_custom_call.1} parent=47 // pred_region
          %470 = dma.done [#allocation12], 256
        $region64: #{tpu_custom_call.1} parent=47 // pred_fallthru
          _
        %s471 = sand.u32 %s70, 1
        %s472 = scalar_lea.sflag [#allocation6], %s471
        %s473 = sand.u32 %s70, 1
        %s474 = smul.addr %s473, 4
        %s475 = scalar_lea.vmem [#allocation5], %s474
        %p476 = pneg %p83
        %p477 = pneg %p80
        %p478 = pneg %p111
        %p479 = pneg %p108
        %p480 = pneg %p139
        %p481 = pneg %p136
        %p482 = pneg %p167
        %p483 = pneg %p164
        %p484 = scmp.lt.s32.totalorder %s40, 0
        %s485 = scalar_select %p484, %s40, 0
        %s486 = scalar_lea.vmem %s4, %s485
        %p487 = pneg %p193
        %p488 = pneg %p190
        %p489 = scmp.lt.s32.totalorder %s40, 0
        %s490 = scalar_select %p489, %s40, 0
        %s491 = scalar_lea.vmem %s5, %s490
        %p492 = pneg %p219
        %p493 = pneg %p216
        %p494 = scmp.lt.s32.totalorder %s40, 0
        %s495 = scalar_select %p494, %s40, 0
        %s496 = scalar_lea.vmem %s6, %s495
        %p497 = pneg %p245
        %p498 = pneg %p242
        %p499 = pneg %p275
        %p500 = pneg %p272
        %s501 = sand.u32 %s262, 1
        %s502 = scalar_lea.sflag [#allocation7], %s501
        %s503 = sand.u32 %s262, 1
        %s504 = smul.addr %s503, 16
        %s505 = scalar_lea.vmem [#allocation13], %s504
        %p506 = pneg %p305
        %p507 = pneg %p302
        %s508 = sand.u32 %s32, 1
        %s509 = scalar_lea.sflag [#allocation15], %s508
        %s510 = sand.u32 %s292, 1
        %s511 = smul.addr %s510, 16
        %s512 = scalar_lea.vmem [#allocation14], %s511
        %p513 = pneg %p335
        %p514 = pneg %p332
        %s515 = sand.u32 %s32, 1
        %s516 = scalar_lea.sflag [#allocation15], %s515
        %s517 = sand.u32 %s322, 1
        %s518 = smul.addr %s517, 16
        %s519 = scalar_lea.vmem [#allocation16], %s518
        %s520 = smul.u32 4, %s41
        %s521 = smul.u32 4, %s41
        %s522 = smul.u32 4, %s41
        %p523 = scmp.lt.s32.totalorder %s40, 0
        %s524 = scalar_select %p523, %s40, 0
        %s525 = scalar_lea.vmem %s4, %s524
        %p526 = scmp.lt.s32.totalorder %s40, 0
        %s527 = scalar_select %p526, %s40, 0
        %s528 = scalar_lea.vmem %s5, %s527
        %p529 = scmp.lt.s32.totalorder %s40, 0
        %s530 = scalar_select %p529, %s40, 0
        %s531 = scalar_lea.vmem %s6, %s530
        %s532 = smul.u32 4, %s40
        %s533 = smul.u32 4, %s40
        %s534 = smul.u32 4, %s40
        %p536 = scmp.eq.s32.totalorder %s41, 0
        // Predicated region
        $region65: #{tpu_custom_call.1} parent=47 // pred_check
          %p537 = pneg %p536
        $region66: #{tpu_custom_call.1} parent=47 // pred_check_branch
          %539 = sbr.rel (%p537) target = $region68
        $region67: #{tpu_custom_call.1} parent=47 // pred_region
          %vm540 = vcmask 261120
          %541 = vst.msk [vmem:[#allocation2] sm:$0xff] %vm540, 0.0
          %542 = vst.msk [vmem:[#allocation3] sm:$0xff] %vm540, 0.0
          %543 = vst.msk [vmem:[#allocation4] sm:$0xff] %vm540, 0.0
        $region68: #{tpu_custom_call.1} parent=47 // pred_fallthru
          _
        %v544 = vld [vmem:[%s454] sm:$0xf]
        %v545 = vld [vmem:[#allocation2] sm:$0xff]
        %v546 = vld [vmem:[#allocation8] sm:$0xf]
        %v547 = vld [vmem:[#allocation8 + $0x4] sm:$0xf]
        %v548 = vld [vmem:[#allocation8 + $0x8] sm:$0xf]
        %v549 = vld [vmem:[#allocation8 + $0xc] sm:$0xf]
        %v554 = vunpack.c.l.b16 %v546
        %v555 = vunpack.c.l.b16 %v547
        %v556 = vunpack.c.l.b16 %v548
        %v557 = vunpack.c.l.b16 %v549
        %v558 = vpack.c.b16 %v555, %v554
        %v559 = vpack.c.b16 %v557, %v556
        %vm562 = vcmask 261120
        %v564 = vsel %vm562, %v544, 0
        %566 = vmatprep.subr.bf16.mxu0 0
        %567 = vmatpush1.bf16.msra.mxu0 0
        %568 = vmatprep.subr.bf16.mxu0 0
        %569 = vmatpush1.bf16.msra.mxu0 0
        %570 = vmatprep.subr.bf16.mxu0 0
        %571 = vmatpush1.bf16.msra.mxu0 0
        %572 = vmatprep.subr.bf16.mxu0 0
        %573 = vmatpush1.bf16.msra.mxu0 0
        %574 = vmatprep.subr.bf16.mxu0 0
        %575 = vmatpush1.bf16.msra.mxu0 0
        %576 = vmatprep.subr.bf16.mxu0 0
        %577 = vmatpush1.bf16.msra.mxu0 0
        %578 = vmatprep.subr.bf16.mxu0 0
        %579 = vmatpush1.bf16.msra.mxu0 %v559
        %580 = vmatprep.subr.bf16.mxu0 0
        %581 = vmatpush1.bf16.msra.mxu0 %v558
        %582 = vmatprep.subr.bf16.mxu0 0
        %583 = vmatpush2.bf16.msra.mxu0 0
        %584 = vmatprep.subr.bf16.mxu0 0
        %585 = vmatpush2.bf16.msra.mxu0 0
        %586 = vmatprep.subr.bf16.mxu0 0
        %587 = vmatpush2.bf16.msra.mxu0 0
        %588 = vmatprep.subr.bf16.mxu0 0
        %589 = vmatpush2.bf16.msra.mxu0 0
        %590 = vmatprep.subr.bf16.mxu0 0
        %591 = vmatpush2.bf16.msra.mxu0 0
        %592 = vmatprep.subr.bf16.mxu0 0
        %593 = vmatpush2.bf16.msra.mxu0 0
        %594 = vmatprep.subr.bf16.mxu0 0
        %595 = vmatpush2.bf16.msra.mxu0 0
        %596 = vmatprep.subr.bf16.mxu0 0
        %597 = vmatpush2.bf16.msra.mxu0 0
        %598 = vmatprep.mubr.bf16.mxu0 0
        %599 = vmatmul.mubr.bf16.gmra.mxu0 %v564
        %v600 = vpop.f32.mrf.mxu0
        %v601 = vadd.f32 0.0, %v600
        %v602 = vpop.f32.mrf.mxu0
        %v603 = vpop.f32.mrf.mxu0
        %v604 = vpop.f32.mrf.mxu0
        %605 = vdwg.mxu0
        %v606 = vadd.f32 %v545, %v601
        %607 = vst.msk [vmem:[#allocation2] sm:$0xff] %vm562, %v606
        %v608 = vld [vmem:[#allocation3] sm:$0xff]
        %v609 = vld [vmem:[#allocation10] sm:$0xf]
        %v610 = vld [vmem:[#allocation10 + $0x4] sm:$0xf]
        %v611 = vld [vmem:[#allocation10 + $0x8] sm:$0xf]
        %v612 = vld [vmem:[#allocation10 + $0xc] sm:$0xf]
        %v617 = vunpack.c.l.b16 %v609
        %v618 = vunpack.c.l.b16 %v610
        %v619 = vunpack.c.l.b16 %v611
        %v620 = vunpack.c.l.b16 %v612
        %v621 = vpack.c.b16 %v618, %v617
        %v622 = vpack.c.b16 %v620, %v619
        %625 = vmatprep.subr.bf16.mxu0 0
        %626 = vmatpush1.bf16.msra.mxu0 0
        %627 = vmatprep.subr.bf16.mxu0 0
        %628 = vmatpush1.bf16.msra.mxu0 0
        %629 = vmatprep.subr.bf16.mxu0 0
        %630 = vmatpush1.bf16.msra.mxu0 0
        %631 = vmatprep.subr.bf16.mxu0 0
        %632 = vmatpush1.bf16.msra.mxu0 0
        %633 = vmatprep.subr.bf16.mxu0 0
        %634 = vmatpush1.bf16.msra.mxu0 0
        %635 = vmatprep.subr.bf16.mxu0 0
        %636 = vmatpush1.bf16.msra.mxu0 0
        %637 = vmatprep.subr.bf16.mxu0 0
        %638 = vmatpush1.bf16.msra.mxu0 %v622
        %639 = vmatprep.subr.bf16.mxu0 0
        %640 = vmatpush1.bf16.msra.mxu0 %v621
        %641 = vmatprep.subr.bf16.mxu0 0
        %642 = vmatpush2.bf16.msra.mxu0 0
        %643 = vmatprep.subr.bf16.mxu0 0
        %644 = vmatpush2.bf16.msra.mxu0 0
        %645 = vmatprep.subr.bf16.mxu0 0
        %646 = vmatpush2.bf16.msra.mxu0 0
        %647 = vmatprep.subr.bf16.mxu0 0
        %648 = vmatpush2.bf16.msra.mxu0 0
        %649 = vmatprep.subr.bf16.mxu0 0
        %650 = vmatpush2.bf16.msra.mxu0 0
        %651 = vmatprep.subr.bf16.mxu0 0
        %652 = vmatpush2.bf16.msra.mxu0 0
        %653 = vmatprep.subr.bf16.mxu0 0
        %654 = vmatpush2.bf16.msra.mxu0 0
        %655 = vmatprep.subr.bf16.mxu0 0
        %656 = vmatpush2.bf16.msra.mxu0 0
        %657 = vmatprep.mubr.bf16.mxu0 0
        %658 = vmatmul.mubr.bf16.gmra.mxu0 %v564
        %v659 = vpop.f32.mrf.mxu0
        %v660 = vadd.f32 0.0, %v659
        %v661 = vpop.f32.mrf.mxu0
        %v662 = vpop.f32.mrf.mxu0
        %v663 = vpop.f32.mrf.mxu0
        %664 = vdwg.mxu0
        %v665 = vadd.f32 %v608, %v660
        %666 = vst.msk [vmem:[#allocation3] sm:$0xff] %vm562, %v665
        %v667 = vld [vmem:[#allocation4] sm:$0xff]
        %v668 = vld [vmem:[#allocation11] sm:$0xf]
        %v669 = vld [vmem:[#allocation11 + $0x4] sm:$0xf]
        %v670 = vld [vmem:[#allocation11 + $0x8] sm:$0xf]
        %v671 = vld [vmem:[#allocation11 + $0xc] sm:$0xf]
        %v676 = vunpack.c.l.b16 %v668
        %v677 = vunpack.c.l.b16 %v669
        %v678 = vunpack.c.l.b16 %v670
        %v679 = vunpack.c.l.b16 %v671
        %v680 = vpack.c.b16 %v677, %v676
        %v681 = vpack.c.b16 %v679, %v678
        %684 = vmatprep.subr.bf16.mxu0 0
        %685 = vmatpush1.bf16.msra.mxu0 0
        %686 = vmatprep.subr.bf16.mxu0 0
        %687 = vmatpush1.bf16.msra.mxu0 0
        %688 = vmatprep.subr.bf16.mxu0 0
        %689 = vmatpush1.bf16.msra.mxu0 0
        %690 = vmatprep.subr.bf16.mxu0 0
        %691 = vmatpush1.bf16.msra.mxu0 0
        %692 = vmatprep.subr.bf16.mxu0 0
        %693 = vmatpush1.bf16.msra.mxu0 0
        %694 = vmatprep.subr.bf16.mxu0 0
        %695 = vmatpush1.bf16.msra.mxu0 0
        %696 = vmatprep.subr.bf16.mxu0 0
        %697 = vmatpush1.bf16.msra.mxu0 %v681
        %698 = vmatprep.subr.bf16.mxu0 0
        %699 = vmatpush1.bf16.msra.mxu0 %v680
        %700 = vmatprep.subr.bf16.mxu0 0
        %701 = vmatpush2.bf16.msra.mxu0 0
        %702 = vmatprep.subr.bf16.mxu0 0
        %703 = vmatpush2.bf16.msra.mxu0 0
        %704 = vmatprep.subr.bf16.mxu0 0
        %705 = vmatpush2.bf16.msra.mxu0 0
        %706 = vmatprep.subr.bf16.mxu0 0
        %707 = vmatpush2.bf16.msra.mxu0 0
        %708 = vmatprep.subr.bf16.mxu0 0
        %709 = vmatpush2.bf16.msra.mxu0 0
        %710 = vmatprep.subr.bf16.mxu0 0
        %711 = vmatpush2.bf16.msra.mxu0 0
        %712 = vmatprep.subr.bf16.mxu0 0
        %713 = vmatpush2.bf16.msra.mxu0 0
        %714 = vmatprep.subr.bf16.mxu0 0
        %715 = vmatpush2.bf16.msra.mxu0 0
        %716 = vmatprep.mubr.bf16.mxu0 0
        %717 = vmatmul.mubr.bf16.gmra.mxu0 %v564
        %v718 = vpop.f32.mrf.mxu0
        %v719 = vadd.f32 0.0, %v718
        %v720 = vpop.f32.mrf.mxu0
        %v721 = vpop.f32.mrf.mxu0
        %v722 = vpop.f32.mrf.mxu0
        %723 = vdwg.mxu0
        %v724 = vadd.f32 %v667, %v719
        %725 = vst.msk [vmem:[#allocation4] sm:$0xff] %vm562, %v724
        // Predicated region
        $region69: #{tpu_custom_call.1} parent=47 // pred_check
          %p726 = pneg %p536
        $region70: #{tpu_custom_call.1} parent=47 // pred_check_branch
          %728 = sbr.rel (%p726) target = $region72
        $region71: #{tpu_custom_call.1} parent=47 // pred_region
          %v729 = vld [vmem:[#allocation2] sm:$0xff]
          %v730 = vld [vmem:[%s525] sm:$0x1]
          %v732 = vlaneseq
          %v733 = vshrl.u32 %v732, 7
          %v734 = vsub.s32 0, %v733
          %v735 = vrot.slane %v730, %v734
          %v737 = vadd.f32 %v729, %v735
          %v738 = vpack.c.bf16 %v737, %v737
          %vm739 = vcmask 60416
          %740 = vst.msk [vmem:[%s505] sm:$0xf] %vm739, %v738
          %v741 = vld [vmem:[#allocation3] sm:$0xff]
          %v742 = vld [vmem:[%s528] sm:$0x1]
          %v744 = vlaneseq
          %v745 = vshrl.u32 %v744, 7
          %v746 = vsub.s32 0, %v745
          %v747 = vrot.slane %v742, %v746
          %v749 = vadd.f32 %v741, %v747
          %v750 = vpack.c.bf16 %v749, %v749
          %751 = vst.msk [vmem:[%s512] sm:$0xf] %vm739, %v750
          %v752 = vld [vmem:[#allocation4] sm:$0xff]
          %v753 = vld [vmem:[%s531] sm:$0x1]
          %v755 = vlaneseq
          %v756 = vshrl.u32 %v755, 7
          %v757 = vsub.s32 0, %v756
          %v758 = vrot.slane %v753, %v757
          %v760 = vadd.f32 %v752, %v758
          %v761 = vpack.c.bf16 %v760, %v760
          %762 = vst.msk [vmem:[%s519] sm:$0xf] %vm739, %v761
          %v763 = vld [vmem:[#allocation2] sm:$0xff]
          %v764 = vld [vmem:[%s525] sm:$0x1]
          %v766 = vlaneseq
          %v767 = vshrl.u32 %v766, 7
          %v768 = vsub.s32 0, %v767
          %v769 = vrot.slane %v764, %v768
          %v771 = vadd.f32 %v763, %v769
          %v772 = vpack.c.bf16 %v771, %v771
          %v774 = vunpack.c.l.b16 %v772
          %v775 = vpack.c.b16 %v774, %v774
          %776 = vrot.lane.b32.xlu0 %v775, 120
          %v777 = vpop.permute.xlu0 %776
          %s779 = scalar_lea.vmem %s505, 4 [#allocation13]
          %780 = vst.msk [vmem:[%s779] sm:$0xf] %vm739, %v777
          %v781 = vld [vmem:[#allocation3] sm:$0xff]
          %v782 = vld [vmem:[%s528] sm:$0x1]
          %v784 = vlaneseq
          %v785 = vshrl.u32 %v784, 7
          %v786 = vsub.s32 0, %v785
          %v787 = vrot.slane %v782, %v786
          %v789 = vadd.f32 %v781, %v787
          %v790 = vpack.c.bf16 %v789, %v789
          %v792 = vunpack.c.l.b16 %v790
          %v793 = vpack.c.b16 %v792, %v792
          %794 = vrot.lane.b32.xlu0 %v793, 120
          %v795 = vpop.permute.xlu0 %794
          %s797 = scalar_lea.vmem %s512, 4 [#allocation14]
          %798 = vst.msk [vmem:[%s797] sm:$0xf] %vm739, %v795
          %v799 = vld [vmem:[#allocation4] sm:$0xff]
          %v800 = vld [vmem:[%s531] sm:$0x1]
          %v802 = vlaneseq
          %v803 = vshrl.u32 %v802, 7
          %v804 = vsub.s32 0, %v803
          %v805 = vrot.slane %v800, %v804
          %v807 = vadd.f32 %v799, %v805
          %v808 = vpack.c.bf16 %v807, %v807
          %v810 = vunpack.c.l.b16 %v808
          %v811 = vpack.c.b16 %v810, %v810
          %812 = vrot.lane.b32.xlu0 %v811, 120
          %v813 = vpop.permute.xlu0 %812
          %s815 = scalar_lea.vmem %s519, 4 [#allocation16]
          %816 = vst.msk [vmem:[%s815] sm:$0xf] %vm739, %v813
          %v817 = vld [vmem:[#allocation2] sm:$0xff]
          %v818 = vld [vmem:[%s525] sm:$0x1]
          %v820 = vlaneseq
          %v821 = vshrl.u32 %v820, 7
          %v822 = vsub.s32 0, %v821
          %v823 = vrot.slane %v818, %v822
          %v825 = vadd.f32 %v817, %v823
          %v826 = vpack.c.bf16 %v825, %v825
          %v828 = vunpack.c.l.b16 %v826
          %v829 = vpack.c.b16 %v828, %v828
          %830 = vrot.lane.b32.xlu0 %v829, 112
          %v831 = vpop.permute.xlu0 %830
          %s833 = scalar_lea.vmem %s505, 8 [#allocation13]
          %834 = vst.msk [vmem:[%s833] sm:$0xf] %vm739, %v831
          %v835 = vld [vmem:[#allocation3] sm:$0xff]
          %v836 = vld [vmem:[%s528] sm:$0x1]
          %v838 = vlaneseq
          %v839 = vshrl.u32 %v838, 7
          %v840 = vsub.s32 0, %v839
          %v841 = vrot.slane %v836, %v840
          %v843 = vadd.f32 %v835, %v841
          %v844 = vpack.c.bf16 %v843, %v843
          %v846 = vunpack.c.l.b16 %v844
          %v847 = vpack.c.b16 %v846, %v846
          %848 = vrot.lane.b32.xlu0 %v847, 112
          %v849 = vpop.permute.xlu0 %848
          %s851 = scalar_lea.vmem %s512, 8 [#allocation14]
          %852 = vst.msk [vmem:[%s851] sm:$0xf] %vm739, %v849
          %v853 = vld [vmem:[#allocation4] sm:$0xff]
          %v854 = vld [vmem:[%s531] sm:$0x1]
          %v856 = vlaneseq
          %v857 = vshrl.u32 %v856, 7
          %v858 = vsub.s32 0, %v857
          %v859 = vrot.slane %v854, %v858
          %v861 = vadd.f32 %v853, %v859
          %v862 = vpack.c.bf16 %v861, %v861
          %v864 = vunpack.c.l.b16 %v862
          %v865 = vpack.c.b16 %v864, %v864
          %866 = vrot.lane.b32.xlu0 %v865, 112
          %v867 = vpop.permute.xlu0 %866
          %s869 = scalar_lea.vmem %s519, 8 [#allocation16]
          %870 = vst.msk [vmem:[%s869] sm:$0xf] %vm739, %v867
          %v871 = vld [vmem:[#allocation2] sm:$0xff]
          %v872 = vld [vmem:[%s525] sm:$0x1]
          %v874 = vlaneseq
          %v875 = vshrl.u32 %v874, 7
          %v876 = vsub.s32 0, %v875
          %v877 = vrot.slane %v872, %v876
          %v879 = vadd.f32 %v871, %v877
          %v880 = vpack.c.bf16 %v879, %v879
          %v882 = vunpack.c.l.b16 %v880
          %v883 = vpack.c.b16 %v882, %v882
          %884 = vrot.lane.b32.xlu0 %v883, 104
          %v885 = vpop.permute.xlu0 %884
          %s887 = scalar_lea.vmem %s505, 12 [#allocation13]
          %888 = vst.msk [vmem:[%s887] sm:$0xf] %vm739, %v885
          %v889 = vld [vmem:[#allocation3] sm:$0xff]
          %v890 = vld [vmem:[%s528] sm:$0x1]
          %v892 = vlaneseq
          %v893 = vshrl.u32 %v892, 7
          %v894 = vsub.s32 0, %v893
          %v895 = vrot.slane %v890, %v894
          %v897 = vadd.f32 %v889, %v895
          %v898 = vpack.c.bf16 %v897, %v897
          %v900 = vunpack.c.l.b16 %v898
          %v901 = vpack.c.b16 %v900, %v900
          %902 = vrot.lane.b32.xlu0 %v901, 104
          %v903 = vpop.permute.xlu0 %902
          %s905 = scalar_lea.vmem %s512, 12 [#allocation14]
          %906 = vst.msk [vmem:[%s905] sm:$0xf] %vm739, %v903
          %v907 = vld [vmem:[#allocation4] sm:$0xff]
          %v908 = vld [vmem:[%s531] sm:$0x1]
          %v910 = vlaneseq
          %v911 = vshrl.u32 %v910, 7
          %v912 = vsub.s32 0, %v911
          %v913 = vrot.slane %v908, %v912
          %v915 = vadd.f32 %v907, %v913
          %v916 = vpack.c.bf16 %v915, %v915
          %v918 = vunpack.c.l.b16 %v916
          %v919 = vpack.c.b16 %v918, %v918
          %920 = vrot.lane.b32.xlu0 %v919, 104
          %v921 = vpop.permute.xlu0 %920
          %s923 = scalar_lea.vmem %s519, 12 [#allocation16]
          %924 = vst.msk [vmem:[%s923] sm:$0xf] %vm739, %v921
        $region72: #{tpu_custom_call.1} parent=47 // pred_fallthru
          _
        %s925 = sand.u32 %s262, 1
        %s926 = scalar_lea.sflag [#allocation7], %s925
        %s927 = sand.u32 %s262, 1
        %s928 = smul.addr %s927, 16
        %s929 = scalar_lea.vmem [#allocation13], %s928
        %s930 = sand.u32 %s32, 1
        %s931 = scalar_lea.sflag [#allocation15], %s930
        %s932 = sand.u32 %s292, 1
        %s933 = smul.addr %s932, 16
        %s934 = scalar_lea.vmem [#allocation14], %s933
        %s935 = sand.u32 %s32, 1
        %s936 = scalar_lea.sflag [#allocation15], %s935
        %s937 = sand.u32 %s322, 1
        %s938 = smul.addr %s937, 16
        %s939 = scalar_lea.vmem [#allocation16], %s938
        // Predicated region
        $region73: #{tpu_custom_call.1} parent=47 // pred_check
          %p940 = pneg %p272
        $region74: #{tpu_custom_call.1} parent=47 // pred_check_branch
          %942 = sbr.rel (%p940) target = $region76
        $region75: #{tpu_custom_call.1} parent=47 // pred_region
          %s943 = smul.u32 4, %s40
          %s945 = ssub.s32 256, 256
          %946 = vsyncadd %s926, %s945
          %s947 = sadd.s32 %s39, %s943
          %s948 = smul.addr %s38, 4
          %s949 = sadd.s32 %s947, %s948
          %s950 = smul.addr %s949, 64
          %s951 = scalar_lea.hbm %s7, %s950
          %s952 = sshll.u32 %s929, 4
          %s953 = int_to_ptr.vmem [resolvable:$true] %s952
          %958 = dma.vmem_to_hbm [thread:$0]  %s953, 256, %s951, %s926, 64, 64, 4
        $region76: #{tpu_custom_call.1} parent=47 // pred_fallthru
          _
        // Predicated region
        $region77: #{tpu_custom_call.1} parent=47 // pred_check
          %p959 = pneg %p302
        $region78: #{tpu_custom_call.1} parent=47 // pred_check_branch
          %961 = sbr.rel (%p959) target = $region80
        $region79: #{tpu_custom_call.1} parent=47 // pred_region
          %s962 = smul.u32 4, %s40
          %s964 = ssub.s32 256, 256
          %965 = vsyncadd %s931, %s964
          %s966 = sadd.s32 %s39, %s962
          %s967 = smul.addr %s38, 4
          %s968 = sadd.s32 %s966, %s967
          %s969 = smul.addr %s968, 64
          %s970 = scalar_lea.hbm %s8, %s969
          %s971 = sshll.u32 %s934, 4
          %s972 = int_to_ptr.vmem [resolvable:$true] %s971
          %977 = dma.vmem_to_hbm [thread:$0]  %s972, 256, %s970, %s931, 64, 64, 4
        $region80: #{tpu_custom_call.1} parent=47 // pred_fallthru
          _
        // Predicated region
        $region81: #{tpu_custom_call.1} parent=47 // pred_check
          %p978 = pneg %p332
        $region82: #{tpu_custom_call.1} parent=47 // pred_check_branch
          %980 = sbr.rel (%p978) target = $region84
        $region83: #{tpu_custom_call.1} parent=47 // pred_region
          %s981 = smul.u32 4, %s40
          %s983 = ssub.s32 256, 256
          %984 = vsyncadd %s936, %s983
          %s985 = sadd.s32 %s39, %s981
          %s986 = smul.addr %s38, 4
          %s987 = sadd.s32 %s985, %s986
          %s988 = smul.addr %s987, 64
          %s989 = scalar_lea.hbm %s9, %s988
          %s990 = sshll.u32 %s939, 4
          %s991 = int_to_ptr.vmem [resolvable:$true] %s990
          %996 = dma.vmem_to_hbm [thread:$0]  %s991, 256, %s989, %s936, 64, 64, 4
        $region84: #{tpu_custom_call.1} parent=47 // pred_fallthru
          _
      $region48: #{tpu_custom_call.1} parent=5 // pred_fallthru
        _
      %p997 = scmp.le.s32.totalorder 2, %s27
      // Predicated region
      $region85: #{tpu_custom_call.1} parent=5 // pred_check
        %p998 = pneg %p997
      $region86: #{tpu_custom_call.1} parent=5 // pred_check_branch
        %1000 = sbr.rel (%p998) target = $region88
      $region87: #{tpu_custom_call.1} parent=5 // pred_region
        %s1001 = ssub.s32 %s27, 2
        // Predicated region
        $region89: #{tpu_custom_call.1} parent=87 // pred_check
          %p1002 = pneg %p278
        $region90: #{tpu_custom_call.1} parent=87 // pred_check_branch
          %1004 = sbr.rel (%p1002) target = $region92
        $region91: #{tpu_custom_call.1} parent=87 // pred_region
          %s1005 = sand.u32 %s263, 1
          %s1006 = scalar_lea.sflag [#allocation7], %s1005
          %s1007 = sand.u32 %s263, 1
          %s1008 = smul.addr %s1007, 16
          %s1009 = scalar_lea.vmem [#allocation13], %s1008
          %1010 = dma.done %s1006, 256
        $region92: #{tpu_custom_call.1} parent=87 // pred_fallthru
          _
        // Predicated region
        $region93: #{tpu_custom_call.1} parent=87 // pred_check
          %p1011 = pneg %p308
        $region94: #{tpu_custom_call.1} parent=87 // pred_check_branch
          %1013 = sbr.rel (%p1011) target = $region96
        $region95: #{tpu_custom_call.1} parent=87 // pred_region
          %s1014 = sand.u32 %s33, 1
          %s1015 = scalar_lea.sflag [#allocation15], %s1014
          %s1016 = sand.u32 %s293, 1
          %s1017 = smul.addr %s1016, 16
          %s1018 = scalar_lea.vmem [#allocation14], %s1017
          %1019 = dma.done %s1015, 256
        $region96: #{tpu_custom_call.1} parent=87 // pred_fallthru
          _
        // Predicated region
        $region97: #{tpu_custom_call.1} parent=87 // pred_check
          %p1020 = pneg %p338
        $region98: #{tpu_custom_call.1} parent=87 // pred_check_branch
          %1022 = sbr.rel (%p1020) target = $region100
        $region99: #{tpu_custom_call.1} parent=87 // pred_region
          %s1023 = sand.u32 %s33, 1
          %s1024 = scalar_lea.sflag [#allocation15], %s1023
          %s1025 = sand.u32 %s323, 1
          %s1026 = smul.addr %s1025, 16
          %s1027 = scalar_lea.vmem [#allocation16], %s1026
          %1028 = dma.done %s1024, 256
        $region100: #{tpu_custom_call.1} parent=87 // pred_fallthru
          _
      $region88: #{tpu_custom_call.1} parent=5 // pred_fallthru
        _
    $region6: #{tpu_custom_call.1} parent=1 // loop_footer
      %s31 = sadd.s32 1, %s27
    $region7: #{tpu_custom_call.1} parent=1 // loop_footer_branch
      %26 = sbr.rel target = $region3
    $region8: #{tpu_custom_call.1} parent=1 // loop_exit
      _
    %1029 = vsyncpa [#allocation6], 1
    %s1030 = scalar_lea.sflag [#allocation6], 1
    %1031 = vsyncpa %s1030, 1
    %1032 = vsyncpa [#allocation9], 1
    %1033 = vsyncpa [#allocation12], 1
    %1034 = vsyncpa [#allocation7], 1
    %s1035 = scalar_lea.sflag [#allocation7], 1
    %1036 = vsyncpa %s1035, 1
    %1037 = vsyncpa [#allocation15], 1
    %s1038 = scalar_lea.sflag [#allocation15], 1
    %1039 = vsyncpa %s1038, 1

</llo_original>
